<compile_context>
chip_gen: v6e
topology: v6e:2x2x1
jax: 0.10.0
libtpu: 0.0.40
codegen_flags: <defaults>
</compile_context>

<pallas_src>
import math
from functools import partial

import jax
import jax.numpy as jnp
from jax import lax
from jax.experimental import pallas as pl
from jax.experimental.pallas import tpu as pltpu

LN_EPS = 1e-12                                   # DistilBERT LayerNorm eps
IGNORE_INDEX = -999
NEG_FILL = float(jnp.finfo(jnp.float32).min)     # torch.finfo(f32).min mask fill


def _vmem_limit_bytes():
    # Leave headroom under physical VMEM (64 MiB v7x, 128 MiB v5e/v6e); always
    # above the 16/32 MiB default scoped limits.
    try:
        cap = int(pltpu.get_tpu_info().vmem_capacity_bytes)
    except Exception:
        cap = 64 * 1024 * 1024
    return int(max(32 * 1024 * 1024,
                   min(cap - 16 * 1024 * 1024, 100 * 1024 * 1024)))


VMEM_LIMIT_BYTES = _vmem_limit_bytes()


def _compiler_params():
    return pltpu.CompilerParams(
        dimension_semantics=("parallel",),        # batch axis -> both TCs on v7x
        vmem_limit_bytes=VMEM_LIMIT_BYTES)


def _resident(shape):
    # Whole-array block, same block index on every grid step -> weight stays
    # resident in VMEM (DMA'd once, not per batch element).
    nd = len(shape)

    def idx(b):
        return (0,) * nd

    return pl.BlockSpec(shape, idx)


# ----------------------------- in-kernel helpers -----------------------------

def _layernorm(x, gamma, beta):
    mu = jnp.mean(x, axis=-1, keepdims=True)
    var = jnp.mean((x - mu) ** 2, axis=-1, keepdims=True)
    return (x - mu) * lax.rsqrt(var + LN_EPS) * gamma + beta


# -------------------------------- kernels ------------------------------------

def encoder_layer_kernel(n_heads, head_dim, fuse_embed, *refs):
    if fuse_embed:
        (x_ref, pos_ref, eg_ref, eb_ref, mask_ref,
         wq_ref, bq_ref, wk_ref, bk_ref, wv_ref, bv_ref, wo_ref, bo_ref,
         g1_ref, be1_ref, w1_ref, b1_ref, w2_ref, b2_ref, g2_ref, be2_ref,
         out_ref) = refs
        # embeddings add + LayerNorm fused into the first layer (saves one
        # (B,S,D) HBM round trip vs a standalone embed kernel).
        x = _layernorm(x_ref[0] + pos_ref[0], eg_ref[...], eb_ref[...])
    else:
        (x_ref, mask_ref,
         wq_ref, bq_ref, wk_ref, bk_ref, wv_ref, bv_ref, wo_ref, bo_ref,
         g1_ref, be1_ref, w1_ref, b1_ref, w2_ref, b2_ref, g2_ref, be2_ref,
         out_ref) = refs
        x = x_ref[0]                              # (S, D) f32

    xb = x.astype(jnp.bfloat16)

    # QKV projections: bf16 MXU matmuls, f32 accumulation, f32 bias add.
    q = jnp.dot(xb, wq_ref[...], preferred_element_type=jnp.float32) + bq_ref[...]
    k = jnp.dot(xb, wk_ref[...], preferred_element_type=jnp.float32) + bk_ref[...]
    v = jnp.dot(xb, wv_ref[...], preferred_element_type=jnp.float32) + bv_ref[...]

    scale = 1.0 / math.sqrt(head_dim)
    qb = (q * scale).astype(jnp.bfloat16)
    kb = k.astype(jnp.bfloat16)
    vb = v.astype(jnp.bfloat16)

    # Head-major (H, S, hd) tensors via static lane slices; the matmuls
    # themselves are single batched dot_generals over all heads.
    def _split(t):
        return jnp.stack(
            [t[:, h * head_dim:(h + 1) * head_dim] for h in range(n_heads)],
            axis=0)

    qh, kh, vh = _split(qb), _split(kb), _split(vb)        # (H, S, hd) bf16

    s = jnp.einsum('hqd,hkd->hqk', qh, kh,
                   preferred_element_type=jnp.float32)     # (H, S, S) f32
    s = jnp.where(mask_ref[...] == 0.0, NEG_FILL, s)       # mask (1,1,S) bcast

    m = jnp.max(s, axis=-1, keepdims=True)                 # softmax in f32
    p = jnp.exp(s - m)
    denom = jnp.sum(p, axis=-1, keepdims=True)
    w = p * pl.reciprocal(denom, approx=True)              # EUP, not VALU divide

    ctx = jnp.einsum('hqk,hkd->hqd', w.astype(jnp.bfloat16), vh,
                     preferred_element_type=jnp.float32)   # (H, S, hd) f32
    context = jnp.concatenate([ctx[h] for h in range(n_heads)], axis=-1)  # (S,D)

    sa = jnp.dot(context.astype(jnp.bfloat16), wo_ref[...],
                 preferred_element_type=jnp.float32) + bo_ref[...]
    x1 = _layernorm(sa + x, g1_ref[...], be1_ref[...])     # post-LN, f32

    # TODO(synk): DistilBERT uses exact erf-GELU; tanh-approx GELU used here.
    h1 = jax.nn.gelu(
        jnp.dot(x1.astype(jnp.bfloat16), w1_ref[...],
                preferred_element_type=jnp.float32) + b1_ref[...],
        approximate=True)
    ffn = jnp.dot(h1.astype(jnp.bfloat16), w2_ref[...],
                  preferred_element_type=jnp.float32) + b2_ref[...]
    out_ref[0] = _layernorm(ffn + x1, g2_ref[...], be2_ref[...])


def heads_kernel(hidden_ref, cs_ref, sp_ref, ep_ref, imp_ref,
                 wqa_ref, bqa_ref, wcls_ref, bcls_ref,
                 scores_ref, start_ref, end_ref, parts_ref):
    b = pl.program_id(0)
    hidden = hidden_ref[0]                                 # (S, D) f32
    seq = hidden.shape[0]
    hb = hidden.astype(jnp.bfloat16)

    # Intensive.qa as one MXU matmul (S,D)@(D,2).
    seq_logits = jnp.dot(hb, wqa_ref[...],
                         preferred_element_type=jnp.float32) + bqa_ref[...]  # (S,2)
    lt = jnp.transpose(seq_logits)                         # (2, S)
    start_row = lt[0:1, :]                                 # (1, S)
    end_row = lt[1:2, :]                                   # (1, S)
    start_ref[0] = start_row
    end_ref[0] = end_row

    # Intensive.linear + Sketchy.linear on CLS as one (1,D)@(D,3) matmul.
    cls_logits = jnp.dot(hb[0:1, :], wcls_ref[...],
                         preferred_element_type=jnp.float32) + bcls_ref[...]  # (1,3)
    int_logit = cls_logits[0:1, 0:1]
    sk0 = cls_logits[0:1, 1:2]
    sk1 = cls_logits[0:1, 2:3]
    score_ext = sk1 - sk0                                  # Sketchy score

    # Intensive._get_score_diff: numpy triu on the [cs:, cs:] sub-matrix with
    # exact zeros remapped to -inf, then amax.  Only (S,S) per grid step.
    cs = cs_ref[b]
    start_col = seq_logits[:, 0:1]                         # (S, 1)
    mat = start_col + end_row                              # (S, S)
    jj = lax.broadcasted_iota(jnp.int32, (seq, seq), 0)
    kk = lax.broadcasted_iota(jnp.int32, (seq, seq), 1)
    valid = (jj >= cs) & (kk >= cs) & (jj <= kk)
    tri = jnp.where(valid, mat, 0.0)
    tri = jnp.where(tri == 0.0, -jnp.inf, tri)             # zeros -> -inf quirk
    score_has = jnp.max(jnp.max(tri, axis=1, keepdims=True),
                        axis=0, keepdims=True)             # (1, 1)
    score_null = start_row[0:1, 0:1] + end_row[0:1, 0:1]
    score_diff = score_null - score_has

    scores_ref[0] = 0.5 * score_ext + 0.5 * score_diff     # (1, 1)

    # ------- per-example loss pieces (cross-batch means done in JAX) ---------
    def _ce_row(logits_row, target):
        m = jnp.max(logits_row, axis=1, keepdims=True)
        lse = m + jnp.log(jnp.sum(jnp.exp(logits_row - m), axis=1, keepdims=True))
        pos = lax.broadcasted_iota(jnp.int32, logits_row.shape, 1)
        picked = jnp.sum(jnp.where(pos == target, logits_row, 0.0),
                         axis=1, keepdims=True)
        w = jnp.where(target != IGNORE_INDEX,
                      jnp.ones((1, 1), jnp.float32), 0.0)  # (1, 1)
        return (lse - picked) * w, w

    sp = sp_ref[b]
    ep = ep_ref[b]
    imp = imp_ref[b]

    start_per, start_w = _ce_row(start_row, sp)
    end_per, end_w = _ce_row(end_row, ep)

    # BCEWithLogitsLoss(intensive_logit, is_impossible) -- per example.
    imp_f = imp.astype(jnp.float32)
    z = int_logit
    bce = jnp.maximum(z, 0.0) - z * imp_f + jnp.log(1.0 + jnp.exp(-jnp.abs(z)))

    # CrossEntropyLoss(sketchy_logits, is_impossible) over 2 classes -- per example.
    m2 = jnp.maximum(sk0, sk1)
    lse2 = m2 + jnp.log(jnp.exp(sk0 - m2) + jnp.exp(sk1 - m2))
    picked2 = jnp.where(imp == 1, sk1, sk0)
    sk_ce = lse2 - picked2

    zero = jnp.zeros((1, 1), jnp.float32)
    parts_ref[0] = jnp.concatenate(
        [start_per, start_w, end_per, end_w, bce, sk_ce, zero, zero], axis=1)


# ------------------------------ JAX glue / wrappers ---------------------------

def encoder_layer(p, x, mask3, n_heads, head_dim, embed=None):
    B, S, D = x.shape
    xspec = pl.BlockSpec((1, S, D), lambda b: (b, 0, 0))
    mspec = pl.BlockSpec((1, 1, S), lambda b: (b, 0, 0))

    weight_args = (p['wq'], p['bq'], p['wk'], p['bk'], p['wv'], p['bv'],
                   p['wo'], p['bo'], p['ln1_g'], p['ln1_b'],
                   p['w1'], p['b1'], p['w2'], p['b2'], p['ln2_g'], p['ln2_b'])
    weight_specs = [_resident(w.shape) for w in weight_args]

    if embed is not None:
        pos, eg, eb = embed
        args = (x, pos, eg, eb, mask3) + weight_args
        in_specs = [xspec, _resident(pos.shape), _resident(eg.shape),
                    _resident(eb.shape), mspec] + weight_specs
    else:
        args = (x, mask3) + weight_args
        in_specs = [xspec, mspec] + weight_specs

    return pl.pallas_call(
        partial(encoder_layer_kernel, n_heads, head_dim, embed is not None),
        grid=(B,),
        out_shape=jax.ShapeDtypeStruct((B, S, D), jnp.float32),
        in_specs=in_specs,
        out_specs=xspec,
        compiler_params=_compiler_params(),
    )(*args)


def heads(params, hidden, context_starts, start_positions, end_positions,
          is_impossibles):
    B, S, D = hidden.shape
    w_qa = params['qa_w']                                        # (D, 2) bf16
    b_qa = params['qa_b'].reshape(1, 2)                          # (1, 2) f32
    w_cls = jnp.concatenate([params['int_w'], params['sk_w']], axis=1)  # (D,3) bf16
    b_cls = jnp.concatenate([params['int_b'], params['sk_b']]).reshape(1, 3)

    smem = pl.BlockSpec(memory_space=pltpu.MemorySpace.SMEM)

    def row(n):
        return pl.BlockSpec((1, 1, n), lambda b: (b, 0, 0))

    args = (hidden,
            context_starts.astype(jnp.int32),
            start_positions.astype(jnp.int32),
            end_positions.astype(jnp.int32),
            is_impossibles.astype(jnp.int32),
            w_qa, b_qa, w_cls, b_cls)
    in_specs = [pl.BlockSpec((1, S, D), lambda b: (b, 0, 0)),
                smem, smem, smem, smem,
                _resident(w_qa.shape), _resident(b_qa.shape),
                _resident(w_cls.shape), _resident(b_cls.shape)]
    out_shapes = (jax.ShapeDtypeStruct((B, 1, 1), jnp.float32),   # scores
                  jax.ShapeDtypeStruct((B, 1, S), jnp.float32),   # start logits
                  jax.ShapeDtypeStruct((B, 1, S), jnp.float32),   # end logits
                  jax.ShapeDtypeStruct((B, 1, 8), jnp.float32))   # loss pieces
    out_specs = (row(1), row(S), row(S), row(8))

    scores3, start3, end3, parts3 = pl.pallas_call(
        heads_kernel,
        grid=(B,),
        out_shape=out_shapes,
        in_specs=in_specs,
        out_specs=out_specs,
        compiler_params=_compiler_params(),
    )(*args)

    scores = scores3[:, 0, 0]
    start_logits = start3[:, 0, :]
    end_logits = end3[:, 0, :]
    parts = parts3[:, 0, :]                                       # (B, 8)

    # Tiny scalar epilogue (cross-batch means) in JAX so the batch grid axis
    # stays "parallel".  Matches torch reductions (incl. CE ignore_index).
    start_loss = jnp.sum(parts[:, 0]) / jnp.sum(parts[:, 1])
    end_loss = jnp.sum(parts[:, 2]) / jnp.sum(parts[:, 3])
    qa_loss = 0.5 * (start_loss + end_loss)
    intensive_loss = 0.5 * qa_loss + 0.5 * jnp.mean(parts[:, 4])
    sketchy_loss = jnp.mean(parts[:, 5])
    loss = 0.5 * sketchy_loss + 0.5 * intensive_loss
    return scores, start_logits, end_logits, loss


def mrc_forward(params, input_ids, attention_mask, context_starts,
                start_positions, end_positions, is_impossibles):
    B, S = input_ids.shape
    # Data-dependent token-embedding gather stays in JAX; its add + LayerNorm
    # are fused into the first encoder-layer kernel (no extra HBM round trip).
    word = jnp.take(params['word_emb'], input_ids, axis=0)        # (B, S, D)
    pos = params['pos_emb'][:S][None]                             # (1, S, D)
    mask3 = attention_mask.reshape(B, 1, S).astype(jnp.float32)

    x = word
    embed = (pos, params['emb_ln_g'], params['emb_ln_b'])
    for li, lp in enumerate(params['layers']):
        x = encoder_layer(lp, x, mask3, params['n_heads'], params['head_dim'],
                          embed=embed if li == 0 else None)

    # nn.Dropout(qa_dropout) -> identity in eval mode.
    return heads(params, x, context_starts, start_positions, end_positions,
                 is_impossibles)


# ------------------------------ deterministic init ----------------------------

def init_params(key, vocab_size, max_pos, dim, n_heads, hidden_dim, n_layers):
    def dense(k, shape, dtype=jnp.bfloat16):
        # Matmul weights stored in bf16 (MXU-native); biases / LN stay f32.
        return (jax.random.normal(k, shape, jnp.float32) * 0.02).astype(dtype)

    keys = jax.random.split(key, 3 + n_layers)
    params = {
        'word_emb': dense(keys[0], (vocab_size, dim), jnp.float32),
        'pos_emb': dense(keys[1], (max_pos, dim), jnp.float32),
        'emb_ln_g': jnp.ones((1, dim), jnp.float32),
        'emb_ln_b': jnp.zeros((1, dim), jnp.float32),
        'n_heads': n_heads,
        'head_dim': dim // n_heads,
        'layers': [],
    }
    for l in range(n_layers):
        lk = jax.random.split(keys[2 + l], 6)
        params['layers'].append({
            'wq': dense(lk[0], (dim, dim)), 'bq': jnp.zeros((1, dim), jnp.float32),
            'wk': dense(lk[1], (dim, dim)), 'bk': jnp.zeros((1, dim), jnp.float32),
            'wv': dense(lk[2], (dim, dim)), 'bv': jnp.zeros((1, dim), jnp.float32),
            'wo': dense(lk[3], (dim, dim)), 'bo': jnp.zeros((1, dim), jnp.float32),
            'ln1_g': jnp.ones((1, dim), jnp.float32),
            'ln1_b': jnp.zeros((1, dim), jnp.float32),
            'w1': dense(lk[4], (dim, hidden_dim)),
            'b1': jnp.zeros((1, hidden_dim), jnp.float32),
            'w2': dense(lk[5], (hidden_dim, dim)),
            'b2': jnp.zeros((1, dim), jnp.float32),
            'ln2_g': jnp.ones((1, dim), jnp.float32),
            'ln2_b': jnp.zeros((1, dim), jnp.float32),
        })
    hk = jax.random.split(keys[2 + n_layers], 3)
    params['sk_w'] = dense(hk[0], (dim, 2))
    params['sk_b'] = jnp.zeros((2,), jnp.float32)
    params['qa_w'] = dense(hk[1], (dim, 2))
    params['qa_b'] = jnp.zeros((2,), jnp.float32)
    params['int_w'] = dense(hk[2], (dim, 1))
    params['int_b'] = jnp.zeros((1,), jnp.float32)
    return params


# ------------------------------------ main ------------------------------------

if __name__ == "__main__":
    B, S, D, H, FFN, L, V = 2, 8, 32, 4, 64, 2, 50

    key = jax.random.PRNGKey(0)
    pkey, ikey = jax.random.split(key)
    params = init_params(pkey, V, S, D, H, FFN, L)

    input_ids = jax.random.randint(ikey, (B, S), 0, V, dtype=jnp.int32)
    attention_mask = jnp.ones((B, S), jnp.int32).at[1, S - 1].set(0)
    context_starts = jnp.array([2, 3], jnp.int32)
    start_positions = jnp.array([3, 0], jnp.int32)
    end_positions = jnp.array([5, 0], jnp.int32)
    is_impossibles = jnp.array([0, 1], jnp.int32)

    scores, start_logits, end_logits, loss = mrc_forward(
        params, input_ids, attention_mask, context_starts,
        start_positions, end_positions, is_impossibles)

    jax.block_until_ready((scores, start_logits, end_logits, loss))
    assert scores.shape == (B,)
    assert start_logits.shape == (B, S) and end_logits.shape == (B, S)
    assert loss.shape == ()
    print("KERNEL_OK")
</pallas_src>

<mosaic_0001>
module attributes {stable_mosaic.version = 11 : i64} {
  func.func @encoder_layer_kernel(%arg0: i32, %arg1: memref<1x8x32xf32, #tpu.memory_space<vmem>>, %arg2: memref<1x8x32xf32, #tpu.memory_space<vmem>>, %arg3: memref<1x32xf32, #tpu.memory_space<vmem>>, %arg4: memref<1x32xf32, #tpu.memory_space<vmem>>, %arg5: memref<1x1x8xf32, #tpu.memory_space<vmem>>, %arg6: memref<32x32xbf16, #tpu.memory_space<vmem>>, %arg7: memref<1x32xf32, #tpu.memory_space<vmem>>, %arg8: memref<32x32xbf16, #tpu.memory_space<vmem>>, %arg9: memref<1x32xf32, #tpu.memory_space<vmem>>, %arg10: memref<32x32xbf16, #tpu.memory_space<vmem>>, %arg11: memref<1x32xf32, #tpu.memory_space<vmem>>, %arg12: memref<32x32xbf16, #tpu.memory_space<vmem>>, %arg13: memref<1x32xf32, #tpu.memory_space<vmem>>, %arg14: memref<1x32xf32, #tpu.memory_space<vmem>>, %arg15: memref<1x32xf32, #tpu.memory_space<vmem>>, %arg16: memref<32x64xbf16, #tpu.memory_space<vmem>>, %arg17: memref<1x64xf32, #tpu.memory_space<vmem>>, %arg18: memref<64x32xbf16, #tpu.memory_space<vmem>>, %arg19: memref<1x32xf32, #tpu.memory_space<vmem>>, %arg20: memref<1x32xf32, #tpu.memory_space<vmem>>, %arg21: memref<1x32xf32, #tpu.memory_space<vmem>>, %arg22: memref<1x8x32xf32, #tpu.memory_space<vmem>>) attributes {dimension_semantics = [#tpu.dimension_semantics<parallel>], iteration_bounds = array<i64: 2>, scalar_prefetch = 0 : i64, scratch_operands = 0 : i64, tpu.core_type = #tpu.core_type<tc>, window_params = [{transform_indices = @transform_0, window_bounds = array<i64: 1, 8, 32>}, {pipeline_mode = #tpu.pipeline_mode<synchronous>, transform_indices = @transform_1, window_bounds = array<i64: 1, 8, 32>}, {pipeline_mode = #tpu.pipeline_mode<synchronous>, transform_indices = @transform_2, window_bounds = array<i64: 1, 32>}, {pipeline_mode = #tpu.pipeline_mode<synchronous>, transform_indices = @transform_3, window_bounds = array<i64: 1, 32>}, {transform_indices = @transform_4, window_bounds = array<i64: 1, 1, 8>}, {pipeline_mode = #tpu.pipeline_mode<synchronous>, transform_indices = @transform_5, window_bounds = array<i64: 32, 32>}, {pipeline_mode = #tpu.pipeline_mode<synchronous>, transform_indices = @transform_6, window_bounds = array<i64: 1, 32>}, {pipeline_mode = #tpu.pipeline_mode<synchronous>, transform_indices = @transform_7, window_bounds = array<i64: 32, 32>}, {pipeline_mode = #tpu.pipeline_mode<synchronous>, transform_indices = @transform_8, window_bounds = array<i64: 1, 32>}, {pipeline_mode = #tpu.pipeline_mode<synchronous>, transform_indices = @transform_9, window_bounds = array<i64: 32, 32>}, {pipeline_mode = #tpu.pipeline_mode<synchronous>, transform_indices = @transform_10, window_bounds = array<i64: 1, 32>}, {pipeline_mode = #tpu.pipeline_mode<synchronous>, transform_indices = @transform_11, window_bounds = array<i64: 32, 32>}, {pipeline_mode = #tpu.pipeline_mode<synchronous>, transform_indices = @transform_12, window_bounds = array<i64: 1, 32>}, {pipeline_mode = #tpu.pipeline_mode<synchronous>, transform_indices = @transform_13, window_bounds = array<i64: 1, 32>}, {pipeline_mode = #tpu.pipeline_mode<synchronous>, transform_indices = @transform_14, window_bounds = array<i64: 1, 32>}, {pipeline_mode = #tpu.pipeline_mode<synchronous>, transform_indices = @transform_15, window_bounds = array<i64: 32, 64>}, {pipeline_mode = #tpu.pipeline_mode<synchronous>, transform_indices = @transform_16, window_bounds = array<i64: 1, 64>}, {pipeline_mode = #tpu.pipeline_mode<synchronous>, transform_indices = @transform_17, window_bounds = array<i64: 64, 32>}, {pipeline_mode = #tpu.pipeline_mode<synchronous>, transform_indices = @transform_18, window_bounds = array<i64: 1, 32>}, {pipeline_mode = #tpu.pipeline_mode<synchronous>, transform_indices = @transform_19, window_bounds = array<i64: 1, 32>}, {pipeline_mode = #tpu.pipeline_mode<synchronous>, transform_indices = @transform_20, window_bounds = array<i64: 1, 32>}, {transform_indices = @transform_21, window_bounds = array<i64: 1, 8, 32>}]} {
    %c0 = arith.constant 0 : index
    %c0_0 = arith.constant 0 : index
    %c0_1 = arith.constant 0 : index
    %0 = vector.load %arg1[%c0, %c0_0, %c0_1] : memref<1x8x32xf32, #tpu.memory_space<vmem>>, vector<1x8x32xf32>
    %1 = vector.shape_cast %0 : vector<1x8x32xf32> to vector<8x32xf32>
    %c0_2 = arith.constant 0 : index
    %c0_3 = arith.constant 0 : index
    %c0_4 = arith.constant 0 : index
    %2 = vector.load %arg2[%c0_2, %c0_3, %c0_4] : memref<1x8x32xf32, #tpu.memory_space<vmem>>, vector<1x8x32xf32>
    %3 = vector.shape_cast %2 : vector<1x8x32xf32> to vector<8x32xf32>
    %4 = arith.addf %1, %3 : vector<8x32xf32>
    %c0_5 = arith.constant 0 : index
    %c0_6 = arith.constant 0 : index
    %5 = vector.load %arg3[%c0_5, %c0_6] : memref<1x32xf32, #tpu.memory_space<vmem>>, vector<1x32xf32>
    %c0_7 = arith.constant 0 : index
    %c0_8 = arith.constant 0 : index
    %6 = vector.load %arg4[%c0_7, %c0_8] : memref<1x32xf32, #tpu.memory_space<vmem>>, vector<1x32xf32>
    %cst = arith.constant dense<0.000000e+00> : vector<8xf32>
    %7 = vector.multi_reduction <add>, %4, %cst [1] : vector<8x32xf32> to vector<8xf32>
    %8 = vector.shape_cast %7 : vector<8xf32> to vector<8x1xf32>
    %cst_9 = arith.constant 3.200000e+01 : f32
    %9 = vector.broadcast %cst_9 : f32 to vector<8x1xf32>
    %10 = arith.divf %8, %9 : vector<8x1xf32>
    %11 = vector.broadcast %10 : vector<8x1xf32> to vector<8x32xf32>
    %12 = arith.subf %4, %11 : vector<8x32xf32>
    %13 = arith.mulf %12, %12 : vector<8x32xf32>
    %cst_10 = arith.constant dense<0.000000e+00> : vector<8xf32>
    %14 = vector.multi_reduction <add>, %13, %cst_10 [1] : vector<8x32xf32> to vector<8xf32>
    %15 = vector.shape_cast %14 : vector<8xf32> to vector<8x1xf32>
    %cst_11 = arith.constant 3.200000e+01 : f32
    %16 = vector.broadcast %cst_11 : f32 to vector<8x1xf32>
    %17 = arith.divf %15, %16 : vector<8x1xf32>
    %18 = vector.broadcast %10 : vector<8x1xf32> to vector<8x32xf32>
    %19 = arith.subf %4, %18 : vector<8x32xf32>
    %cst_12 = arith.constant 9.99999996E-13 : f32
    %20 = vector.broadcast %cst_12 : f32 to vector<8x1xf32>
    %21 = arith.addf %17, %20 : vector<8x1xf32>
    %22 = math.rsqrt %21 : vector<8x1xf32>
    %23 = vector.broadcast %22 : vector<8x1xf32> to vector<8x32xf32>
    %24 = arith.mulf %19, %23 : vector<8x32xf32>
    %25 = vector.broadcast %5 : vector<1x32xf32> to vector<8x32xf32>
    %26 = arith.mulf %24, %25 : vector<8x32xf32>
    %27 = vector.broadcast %6 : vector<1x32xf32> to vector<8x32xf32>
    %28 = arith.addf %26, %27 : vector<8x32xf32>
    %29 = arith.truncf %28 : vector<8x32xf32> to vector<8x32xbf16>
    %c0_13 = arith.constant 0 : index
    %c0_14 = arith.constant 0 : index
    %30 = vector.load %arg6[%c0_13, %c0_14] : memref<32x32xbf16, #tpu.memory_space<vmem>>, vector<32x32xbf16>
    %cst_15 = arith.constant dense<0.000000e+00> : vector<8x32xf32>
    %31 = tpu.matmul %29, %30, %cst_15 {dimension_numbers = #tpu.dot_dimension_numbers<[1], [0], [0], [1], [0, 0, 1, 1], [], []>} : vector<8x32xbf16>, vector<32x32xbf16>, vector<8x32xf32> -> vector<8x32xf32>
    %c0_16 = arith.constant 0 : index
    %c0_17 = arith.constant 0 : index
    %32 = vector.load %arg7[%c0_16, %c0_17] : memref<1x32xf32, #tpu.memory_space<vmem>>, vector<1x32xf32>
    %33 = vector.broadcast %32 : vector<1x32xf32> to vector<8x32xf32>
    %34 = arith.addf %31, %33 : vector<8x32xf32>
    %c0_18 = arith.constant 0 : index
    %c0_19 = arith.constant 0 : index
    %35 = vector.load %arg8[%c0_18, %c0_19] : memref<32x32xbf16, #tpu.memory_space<vmem>>, vector<32x32xbf16>
    %cst_20 = arith.constant dense<0.000000e+00> : vector<8x32xf32>
    %36 = tpu.matmul %29, %35, %cst_20 {dimension_numbers = #tpu.dot_dimension_numbers<[1], [0], [0], [1], [0, 0, 1, 1], [], []>} : vector<8x32xbf16>, vector<32x32xbf16>, vector<8x32xf32> -> vector<8x32xf32>
    %c0_21 = arith.constant 0 : index
    %c0_22 = arith.constant 0 : index
    %37 = vector.load %arg9[%c0_21, %c0_22] : memref<1x32xf32, #tpu.memory_space<vmem>>, vector<1x32xf32>
    %38 = vector.broadcast %37 : vector<1x32xf32> to vector<8x32xf32>
    %39 = arith.addf %36, %38 : vector<8x32xf32>
    %c0_23 = arith.constant 0 : index
    %c0_24 = arith.constant 0 : index
    %40 = vector.load %arg10[%c0_23, %c0_24] : memref<32x32xbf16, #tpu.memory_space<vmem>>, vector<32x32xbf16>
    %cst_25 = arith.constant dense<0.000000e+00> : vector<8x32xf32>
    %41 = tpu.matmul %29, %40, %cst_25 {dimension_numbers = #tpu.dot_dimension_numbers<[1], [0], [0], [1], [0, 0, 1, 1], [], []>} : vector<8x32xbf16>, vector<32x32xbf16>, vector<8x32xf32> -> vector<8x32xf32>
    %c0_26 = arith.constant 0 : index
    %c0_27 = arith.constant 0 : index
    %42 = vector.load %arg11[%c0_26, %c0_27] : memref<1x32xf32, #tpu.memory_space<vmem>>, vector<1x32xf32>
    %43 = vector.broadcast %42 : vector<1x32xf32> to vector<8x32xf32>
    %44 = arith.addf %41, %43 : vector<8x32xf32>
    %cst_28 = arith.constant 0.353553385 : f32
    %45 = vector.broadcast %cst_28 : f32 to vector<8x32xf32>
    %46 = arith.mulf %34, %45 : vector<8x32xf32>
    %47 = arith.truncf %46 : vector<8x32xf32> to vector<8x32xbf16>
    %48 = arith.truncf %39 : vector<8x32xf32> to vector<8x32xbf16>
    %49 = arith.truncf %44 : vector<8x32xf32> to vector<8x32xbf16>
    %50 = vector.extract_strided_slice %47 {offsets = [0, 0], sizes = [8, 8], strides = [1, 1]} : vector<8x32xbf16> to vector<8x8xbf16>
    %51 = vector.extract_strided_slice %47 {offsets = [0, 8], sizes = [8, 8], strides = [1, 1]} : vector<8x32xbf16> to vector<8x8xbf16>
    %52 = vector.extract_strided_slice %47 {offsets = [0, 16], sizes = [8, 8], strides = [1, 1]} : vector<8x32xbf16> to vector<8x8xbf16>
    %53 = vector.extract_strided_slice %47 {offsets = [0, 24], sizes = [8, 8], strides = [1, 1]} : vector<8x32xbf16> to vector<8x8xbf16>
    %54 = vector.shape_cast %50 : vector<8x8xbf16> to vector<1x8x8xbf16>
    %55 = vector.shape_cast %51 : vector<8x8xbf16> to vector<1x8x8xbf16>
    %56 = vector.shape_cast %52 : vector<8x8xbf16> to vector<1x8x8xbf16>
    %57 = vector.shape_cast %53 : vector<8x8xbf16> to vector<1x8x8xbf16>
    %58 = tpu.concatenate %54, %55, %56, %57 in 0 : vector<1x8x8xbf16>, vector<1x8x8xbf16>, vector<1x8x8xbf16>, vector<1x8x8xbf16> -> vector<4x8x8xbf16>
    %59 = vector.extract_strided_slice %48 {offsets = [0, 0], sizes = [8, 8], strides = [1, 1]} : vector<8x32xbf16> to vector<8x8xbf16>
    %60 = vector.extract_strided_slice %48 {offsets = [0, 8], sizes = [8, 8], strides = [1, 1]} : vector<8x32xbf16> to vector<8x8xbf16>
    %61 = vector.extract_strided_slice %48 {offsets = [0, 16], sizes = [8, 8], strides = [1, 1]} : vector<8x32xbf16> to vector<8x8xbf16>
    %62 = vector.extract_strided_slice %48 {offsets = [0, 24], sizes = [8, 8], strides = [1, 1]} : vector<8x32xbf16> to vector<8x8xbf16>
    %63 = vector.shape_cast %59 : vector<8x8xbf16> to vector<1x8x8xbf16>
    %64 = vector.shape_cast %60 : vector<8x8xbf16> to vector<1x8x8xbf16>
    %65 = vector.shape_cast %61 : vector<8x8xbf16> to vector<1x8x8xbf16>
    %66 = vector.shape_cast %62 : vector<8x8xbf16> to vector<1x8x8xbf16>
    %67 = tpu.concatenate %63, %64, %65, %66 in 0 : vector<1x8x8xbf16>, vector<1x8x8xbf16>, vector<1x8x8xbf16>, vector<1x8x8xbf16> -> vector<4x8x8xbf16>
    %68 = vector.extract_strided_slice %49 {offsets = [0, 0], sizes = [8, 8], strides = [1, 1]} : vector<8x32xbf16> to vector<8x8xbf16>
    %69 = vector.extract_strided_slice %49 {offsets = [0, 8], sizes = [8, 8], strides = [1, 1]} : vector<8x32xbf16> to vector<8x8xbf16>
    %70 = vector.extract_strided_slice %49 {offsets = [0, 16], sizes = [8, 8], strides = [1, 1]} : vector<8x32xbf16> to vector<8x8xbf16>
    %71 = vector.extract_strided_slice %49 {offsets = [0, 24], sizes = [8, 8], strides = [1, 1]} : vector<8x32xbf16> to vector<8x8xbf16>
    %72 = vector.shape_cast %68 : vector<8x8xbf16> to vector<1x8x8xbf16>
    %73 = vector.shape_cast %69 : vector<8x8xbf16> to vector<1x8x8xbf16>
    %74 = vector.shape_cast %70 : vector<8x8xbf16> to vector<1x8x8xbf16>
    %75 = vector.shape_cast %71 : vector<8x8xbf16> to vector<1x8x8xbf16>
    %76 = tpu.concatenate %72, %73, %74, %75 in 0 : vector<1x8x8xbf16>, vector<1x8x8xbf16>, vector<1x8x8xbf16>, vector<1x8x8xbf16> -> vector<4x8x8xbf16>
    "tpu.trace_start"() <{level = 10 : i32, message = "hqd,hkd->hqk"}> : () -> ()
    %cst_29 = arith.constant dense<0.000000e+00> : vector<4x8x8xf32>
    %77 = tpu.matmul %58, %67, %cst_29 {dimension_numbers = #tpu.dot_dimension_numbers<[2], [2], [1], [1], [0, 0, 0, 1, 1, 1], [0], [0]>} : vector<4x8x8xbf16>, vector<4x8x8xbf16>, vector<4x8x8xf32> -> vector<4x8x8xf32>
    "tpu.trace_stop"() : () -> ()
    %c0_30 = arith.constant 0 : index
    %c0_31 = arith.constant 0 : index
    %c0_32 = arith.constant 0 : index
    %78 = vector.load %arg5[%c0_30, %c0_31, %c0_32] : memref<1x1x8xf32, #tpu.memory_space<vmem>>, vector<1x1x8xf32>
    %cst_33 = arith.constant 0.000000e+00 : f32
    %79 = vector.broadcast %cst_33 : f32 to vector<1x1x8xf32>
    %80 = arith.cmpf oeq, %78, %79 : vector<1x1x8xf32>
    %cst_34 = arith.constant -3.40282347E+38 : f32
    %81 = vector.shape_cast %80 : vector<1x1x8xi1> to vector<1x1x8xi1>
    %82 = vector.broadcast %81 : vector<1x1x8xi1> to vector<4x8x8xi1>
    %83 = vector.broadcast %cst_34 : f32 to vector<4x8x8xf32>
    %84 = arith.select %82, %83, %77 : vector<4x8x8xi1>, vector<4x8x8xf32>
    %cst_35 = arith.constant dense<0xFF800000> : vector<4x8xf32>
    %85 = vector.multi_reduction <maximumf>, %84, %cst_35 [2] : vector<4x8x8xf32> to vector<4x8xf32>
    %86 = vector.shape_cast %85 : vector<4x8xf32> to vector<4x8x1xf32>
    %87 = vector.broadcast %86 : vector<4x8x1xf32> to vector<4x8x8xf32>
    %88 = arith.subf %84, %87 : vector<4x8x8xf32>
    %89 = math.exp %88 : vector<4x8x8xf32>
    %cst_36 = arith.constant dense<0.000000e+00> : vector<4x8xf32>
    %90 = vector.multi_reduction <add>, %89, %cst_36 [2] : vector<4x8x8xf32> to vector<4x8xf32>
    %91 = vector.shape_cast %90 : vector<4x8xf32> to vector<4x8x1xf32>
    %92 = tpu.reciprocal %91 {approx = true} : vector<4x8x1xf32> -> vector<4x8x1xf32>
    %93 = vector.broadcast %92 : vector<4x8x1xf32> to vector<4x8x8xf32>
    %94 = arith.mulf %89, %93 : vector<4x8x8xf32>
    %95 = arith.truncf %94 : vector<4x8x8xf32> to vector<4x8x8xbf16>
    "tpu.trace_start"() <{level = 10 : i32, message = "hqk,hkd->hqd"}> : () -> ()
    %cst_37 = arith.constant dense<0.000000e+00> : vector<4x8x8xf32>
    %96 = tpu.matmul %95, %76, %cst_37 {dimension_numbers = #tpu.dot_dimension_numbers<[2], [1], [1], [2], [0, 0, 0, 1, 1, 2], [0], [0]>} : vector<4x8x8xbf16>, vector<4x8x8xbf16>, vector<4x8x8xf32> -> vector<4x8x8xf32>
    "tpu.trace_stop"() : () -> ()
    %97 = vector.extract_strided_slice %96 {offsets = [0, 0, 0], sizes = [1, 8, 8], strides = [1, 1, 1]} : vector<4x8x8xf32> to vector<1x8x8xf32>
    %98 = vector.shape_cast %97 : vector<1x8x8xf32> to vector<8x8xf32>
    %99 = vector.extract_strided_slice %96 {offsets = [1, 0, 0], sizes = [1, 8, 8], strides = [1, 1, 1]} : vector<4x8x8xf32> to vector<1x8x8xf32>
    %100 = vector.shape_cast %99 : vector<1x8x8xf32> to vector<8x8xf32>
    %101 = vector.extract_strided_slice %96 {offsets = [2, 0, 0], sizes = [1, 8, 8], strides = [1, 1, 1]} : vector<4x8x8xf32> to vector<1x8x8xf32>
    %102 = vector.shape_cast %101 : vector<1x8x8xf32> to vector<8x8xf32>
    %103 = vector.extract_strided_slice %96 {offsets = [3, 0, 0], sizes = [1, 8, 8], strides = [1, 1, 1]} : vector<4x8x8xf32> to vector<1x8x8xf32>
    %104 = vector.shape_cast %103 : vector<1x8x8xf32> to vector<8x8xf32>
    %105 = tpu.concatenate %98, %100, %102, %104 in 1 : vector<8x8xf32>, vector<8x8xf32>, vector<8x8xf32>, vector<8x8xf32> -> vector<8x32xf32>
    %106 = arith.truncf %105 : vector<8x32xf32> to vector<8x32xbf16>
    %c0_38 = arith.constant 0 : index
    %c0_39 = arith.constant 0 : index
    %107 = vector.load %arg12[%c0_38, %c0_39] : memref<32x32xbf16, #tpu.memory_space<vmem>>, vector<32x32xbf16>
    %cst_40 = arith.constant dense<0.000000e+00> : vector<8x32xf32>
    %108 = tpu.matmul %106, %107, %cst_40 {dimension_numbers = #tpu.dot_dimension_numbers<[1], [0], [0], [1], [0, 0, 1, 1], [], []>} : vector<8x32xbf16>, vector<32x32xbf16>, vector<8x32xf32> -> vector<8x32xf32>
    %c0_41 = arith.constant 0 : index
    %c0_42 = arith.constant 0 : index
    %109 = vector.load %arg13[%c0_41, %c0_42] : memref<1x32xf32, #tpu.memory_space<vmem>>, vector<1x32xf32>
    %110 = vector.broadcast %109 : vector<1x32xf32> to vector<8x32xf32>
    %111 = arith.addf %108, %110 : vector<8x32xf32>
    %112 = arith.addf %111, %28 : vector<8x32xf32>
    %c0_43 = arith.constant 0 : index
    %c0_44 = arith.constant 0 : index
    %113 = vector.load %arg14[%c0_43, %c0_44] : memref<1x32xf32, #tpu.memory_space<vmem>>, vector<1x32xf32>
    %c0_45 = arith.constant 0 : index
    %c0_46 = arith.constant 0 : index
    %114 = vector.load %arg15[%c0_45, %c0_46] : memref<1x32xf32, #tpu.memory_space<vmem>>, vector<1x32xf32>
    %cst_47 = arith.constant dense<0.000000e+00> : vector<8xf32>
    %115 = vector.multi_reduction <add>, %112, %cst_47 [1] : vector<8x32xf32> to vector<8xf32>
    %116 = vector.shape_cast %115 : vector<8xf32> to vector<8x1xf32>
    %cst_48 = arith.constant 3.200000e+01 : f32
    %117 = vector.broadcast %cst_48 : f32 to vector<8x1xf32>
    %118 = arith.divf %116, %117 : vector<8x1xf32>
    %119 = vector.broadcast %118 : vector<8x1xf32> to vector<8x32xf32>
    %120 = arith.subf %112, %119 : vector<8x32xf32>
    %121 = arith.mulf %120, %120 : vector<8x32xf32>
    %cst_49 = arith.constant dense<0.000000e+00> : vector<8xf32>
    %122 = vector.multi_reduction <add>, %121, %cst_49 [1] : vector<8x32xf32> to vector<8xf32>
    %123 = vector.shape_cast %122 : vector<8xf32> to vector<8x1xf32>
    %cst_50 = arith.constant 3.200000e+01 : f32
    %124 = vector.broadcast %cst_50 : f32 to vector<8x1xf32>
    %125 = arith.divf %123, %124 : vector<8x1xf32>
    %126 = vector.broadcast %118 : vector<8x1xf32> to vector<8x32xf32>
    %127 = arith.subf %112, %126 : vector<8x32xf32>
    %cst_51 = arith.constant 9.99999996E-13 : f32
    %128 = vector.broadcast %cst_51 : f32 to vector<8x1xf32>
    %129 = arith.addf %125, %128 : vector<8x1xf32>
    %130 = math.rsqrt %129 : vector<8x1xf32>
    %131 = vector.broadcast %130 : vector<8x1xf32> to vector<8x32xf32>
    %132 = arith.mulf %127, %131 : vector<8x32xf32>
    %133 = vector.broadcast %113 : vector<1x32xf32> to vector<8x32xf32>
    %134 = arith.mulf %132, %133 : vector<8x32xf32>
    %135 = vector.broadcast %114 : vector<1x32xf32> to vector<8x32xf32>
    %136 = arith.addf %134, %135 : vector<8x32xf32>
    %137 = arith.truncf %136 : vector<8x32xf32> to vector<8x32xbf16>
    %c0_52 = arith.constant 0 : index
    %c0_53 = arith.constant 0 : index
    %138 = vector.load %arg16[%c0_52, %c0_53] : memref<32x64xbf16, #tpu.memory_space<vmem>>, vector<32x64xbf16>
    %cst_54 = arith.constant dense<0.000000e+00> : vector<8x64xf32>
    %139 = tpu.matmul %137, %138, %cst_54 {dimension_numbers = #tpu.dot_dimension_numbers<[1], [0], [0], [1], [0, 0, 1, 1], [], []>} : vector<8x32xbf16>, vector<32x64xbf16>, vector<8x64xf32> -> vector<8x64xf32>
    %c0_55 = arith.constant 0 : index
    %c0_56 = arith.constant 0 : index
    %140 = vector.load %arg17[%c0_55, %c0_56] : memref<1x64xf32, #tpu.memory_space<vmem>>, vector<1x64xf32>
    %141 = vector.broadcast %140 : vector<1x64xf32> to vector<8x64xf32>
    %142 = arith.addf %139, %141 : vector<8x64xf32>
    %143 = arith.mulf %142, %142 : vector<8x64xf32>
    %144 = arith.mulf %142, %143 : vector<8x64xf32>
    %cst_57 = arith.constant 4.471500e-02 : f32
    %145 = vector.broadcast %cst_57 : f32 to vector<8x64xf32>
    %146 = arith.mulf %145, %144 : vector<8x64xf32>
    %147 = arith.addf %142, %146 : vector<8x64xf32>
    %cst_58 = arith.constant 0.797884583 : f32
    %148 = vector.broadcast %cst_58 : f32 to vector<8x64xf32>
    %149 = arith.mulf %148, %147 : vector<8x64xf32>
    %150 = math.tanh %149 : vector<8x64xf32>
    %cst_59 = arith.constant 1.000000e+00 : f32
    %151 = vector.broadcast %cst_59 : f32 to vector<8x64xf32>
    %152 = arith.addf %151, %150 : vector<8x64xf32>
    %cst_60 = arith.constant 5.000000e-01 : f32
    %153 = vector.broadcast %cst_60 : f32 to vector<8x64xf32>
    %154 = arith.mulf %153, %152 : vector<8x64xf32>
    %155 = arith.mulf %142, %154 : vector<8x64xf32>
    %156 = arith.truncf %155 : vector<8x64xf32> to vector<8x64xbf16>
    %c0_61 = arith.constant 0 : index
    %c0_62 = arith.constant 0 : index
    %157 = vector.load %arg18[%c0_61, %c0_62] : memref<64x32xbf16, #tpu.memory_space<vmem>>, vector<64x32xbf16>
    %cst_63 = arith.constant dense<0.000000e+00> : vector<8x32xf32>
    %158 = tpu.matmul %156, %157, %cst_63 {dimension_numbers = #tpu.dot_dimension_numbers<[1], [0], [0], [1], [0, 0, 1, 1], [], []>} : vector<8x64xbf16>, vector<64x32xbf16>, vector<8x32xf32> -> vector<8x32xf32>
    %c0_64 = arith.constant 0 : index
    %c0_65 = arith.constant 0 : index
    %159 = vector.load %arg19[%c0_64, %c0_65] : memref<1x32xf32, #tpu.memory_space<vmem>>, vector<1x32xf32>
    %160 = vector.broadcast %159 : vector<1x32xf32> to vector<8x32xf32>
    %161 = arith.addf %158, %160 : vector<8x32xf32>
    %162 = arith.addf %161, %136 : vector<8x32xf32>
    %c0_66 = arith.constant 0 : index
    %c0_67 = arith.constant 0 : index
    %163 = vector.load %arg20[%c0_66, %c0_67] : memref<1x32xf32, #tpu.memory_space<vmem>>, vector<1x32xf32>
    %c0_68 = arith.constant 0 : index
    %c0_69 = arith.constant 0 : index
    %164 = vector.load %arg21[%c0_68, %c0_69] : memref<1x32xf32, #tpu.memory_space<vmem>>, vector<1x32xf32>
    %cst_70 = arith.constant dense<0.000000e+00> : vector<8xf32>
    %165 = vector.multi_reduction <add>, %162, %cst_70 [1] : vector<8x32xf32> to vector<8xf32>
    %166 = vector.shape_cast %165 : vector<8xf32> to vector<8x1xf32>
    %cst_71 = arith.constant 3.200000e+01 : f32
    %167 = vector.broadcast %cst_71 : f32 to vector<8x1xf32>
    %168 = arith.divf %166, %167 : vector<8x1xf32>
    %169 = vector.broadcast %168 : vector<8x1xf32> to vector<8x32xf32>
    %170 = arith.subf %162, %169 : vector<8x32xf32>
    %171 = arith.mulf %170, %170 : vector<8x32xf32>
    %cst_72 = arith.constant dense<0.000000e+00> : vector<8xf32>
    %172 = vector.multi_reduction <add>, %171, %cst_72 [1] : vector<8x32xf32> to vector<8xf32>
    %173 = vector.shape_cast %172 : vector<8xf32> to vector<8x1xf32>
    %cst_73 = arith.constant 3.200000e+01 : f32
    %174 = vector.broadcast %cst_73 : f32 to vector<8x1xf32>
    %175 = arith.divf %173, %174 : vector<8x1xf32>
    %176 = vector.broadcast %168 : vector<8x1xf32> to vector<8x32xf32>
    %177 = arith.subf %162, %176 : vector<8x32xf32>
    %cst_74 = arith.constant 9.99999996E-13 : f32
    %178 = vector.broadcast %cst_74 : f32 to vector<8x1xf32>
    %179 = arith.addf %175, %178 : vector<8x1xf32>
    %180 = math.rsqrt %179 : vector<8x1xf32>
    %181 = vector.broadcast %180 : vector<8x1xf32> to vector<8x32xf32>
    %182 = arith.mulf %177, %181 : vector<8x32xf32>
    %183 = vector.broadcast %163 : vector<1x32xf32> to vector<8x32xf32>
    %184 = arith.mulf %182, %183 : vector<8x32xf32>
    %185 = vector.broadcast %164 : vector<1x32xf32> to vector<8x32xf32>
    %186 = arith.addf %184, %185 : vector<8x32xf32>
    %c0_75 = arith.constant 0 : index
    %c0_76 = arith.constant 0 : index
    %c0_77 = arith.constant 0 : index
    %187 = vector.load %arg22[%c0_75, %c0_76, %c0_77] : memref<1x8x32xf32, #tpu.memory_space<vmem>>, vector<1x8x32xf32>
    %188 = vector.shape_cast %187 : vector<1x8x32xf32> to vector<8x32xf32>
    %189 = vector.shape_cast %186 : vector<8x32xf32> to vector<1x8x32xf32>
    tpu.vector_store %arg22[%c0_75, %c0_76, %c0_77], %189 {strides = array<i32>} : memref<1x8x32xf32, #tpu.memory_space<vmem>>, vector<1x8x32xf32>,
    return
  }
  func.func @transform_0(%arg0: i32) -> (i32, i32, i32) {
    %c0_i32 = arith.constant 0 : i32
    %c0_i32_0 = arith.constant 0 : i32
    %c0_i32_1 = arith.constant 0 : i32
    return %arg0, %c0_i32, %c0_i32_0 : i32, i32, i32
  }
  func.func @transform_1(%arg0: i32) -> (i32, i32, i32) {
    %c0_i32 = arith.constant 0 : i32
    %c0_i32_0 = arith.constant 0 : i32
    %c0_i32_1 = arith.constant 0 : i32
    %c0_i32_2 = arith.constant 0 : i32
    return %c0_i32, %c0_i32_0, %c0_i32_1 : i32, i32, i32
  }
  func.func @transform_2(%arg0: i32) -> (i32, i32) {
    %c0_i32 = arith.constant 0 : i32
    %c0_i32_0 = arith.constant 0 : i32
    %c0_i32_1 = arith.constant 0 : i32
    return %c0_i32, %c0_i32_0 : i32, i32
  }
  func.func @transform_3(%arg0: i32) -> (i32, i32) {
    %c0_i32 = arith.constant 0 : i32
    %c0_i32_0 = arith.constant 0 : i32
    %c0_i32_1 = arith.constant 0 : i32
    return %c0_i32, %c0_i32_0 : i32, i32
  }
  func.func @transform_4(%arg0: i32) -> (i32, i32, i32) {
    %c0_i32 = arith.constant 0 : i32
    %c0_i32_0 = arith.constant 0 : i32
    %c0_i32_1 = arith.constant 0 : i32
    return %arg0, %c0_i32, %c0_i32_0 : i32, i32, i32
  }
  func.func @transform_5(%arg0: i32) -> (i32, i32) {
    %c0_i32 = arith.constant 0 : i32
    %c0_i32_0 = arith.constant 0 : i32
    %c0_i32_1 = arith.constant 0 : i32
    return %c0_i32, %c0_i32_0 : i32, i32
  }
  func.func @transform_6(%arg0: i32) -> (i32, i32) {
    %c0_i32 = arith.constant 0 : i32
    %c0_i32_0 = arith.constant 0 : i32
    %c0_i32_1 = arith.constant 0 : i32
    return %c0_i32, %c0_i32_0 : i32, i32
  }
  func.func @transform_7(%arg0: i32) -> (i32, i32) {
    %c0_i32 = arith.constant 0 : i32
    %c0_i32_0 = arith.constant 0 : i32
    %c0_i32_1 = arith.constant 0 : i32
    return %c0_i32, %c0_i32_0 : i32, i32
  }
  func.func @transform_8(%arg0: i32) -> (i32, i32) {
    %c0_i32 = arith.constant 0 : i32
    %c0_i32_0 = arith.constant 0 : i32
    %c0_i32_1 = arith.constant 0 : i32
    return %c0_i32, %c0_i32_0 : i32, i32
  }
  func.func @transform_9(%arg0: i32) -> (i32, i32) {
    %c0_i32 = arith.constant 0 : i32
    %c0_i32_0 = arith.constant 0 : i32
    %c0_i32_1 = arith.constant 0 : i32
    return %c0_i32, %c0_i32_0 : i32, i32
  }
  func.func @transform_10(%arg0: i32) -> (i32, i32) {
    %c0_i32 = arith.constant 0 : i32
    %c0_i32_0 = arith.constant 0 : i32
    %c0_i32_1 = arith.constant 0 : i32
    return %c0_i32, %c0_i32_0 : i32, i32
  }
  func.func @transform_11(%arg0: i32) -> (i32, i32) {
    %c0_i32 = arith.constant 0 : i32
    %c0_i32_0 = arith.constant 0 : i32
    %c0_i32_1 = arith.constant 0 : i32
    return %c0_i32, %c0_i32_0 : i32, i32
  }
  func.func @transform_12(%arg0: i32) -> (i32, i32) {
    %c0_i32 = arith.constant 0 : i32
    %c0_i32_0 = arith.constant 0 : i32
    %c0_i32_1 = arith.constant 0 : i32
    return %c0_i32, %c0_i32_0 : i32, i32
  }
  func.func @transform_13(%arg0: i32) -> (i32, i32) {
    %c0_i32 = arith.constant 0 : i32
    %c0_i32_0 = arith.constant 0 : i32
    %c0_i32_1 = arith.constant 0 : i32
    return %c0_i32, %c0_i32_0 : i32, i32
  }
  func.func @transform_14(%arg0: i32) -> (i32, i32) {
    %c0_i32 = arith.constant 0 : i32
    %c0_i32_0 = arith.constant 0 : i32
    %c0_i32_1 = arith.constant 0 : i32
    return %c0_i32, %c0_i32_0 : i32, i32
  }
  func.func @transform_15(%arg0: i32) -> (i32, i32) {
    %c0_i32 = arith.constant 0 : i32
    %c0_i32_0 = arith.constant 0 : i32
    %c0_i32_1 = arith.constant 0 : i32
    return %c0_i32, %c0_i32_0 : i32, i32
  }
  func.func @transform_16(%arg0: i32) -> (i32, i32) {
    %c0_i32 = arith.constant 0 : i32
    %c0_i32_0 = arith.constant 0 : i32
    %c0_i32_1 = arith.constant 0 : i32
    return %c0_i32, %c0_i32_0 : i32, i32
  }
  func.func @transform_17(%arg0: i32) -> (i32, i32) {
    %c0_i32 = arith.constant 0 : i32
    %c0_i32_0 = arith.constant 0 : i32
    %c0_i32_1 = arith.constant 0 : i32
    return %c0_i32, %c0_i32_0 : i32, i32
  }
  func.func @transform_18(%arg0: i32) -> (i32, i32) {
    %c0_i32 = arith.constant 0 : i32
    %c0_i32_0 = arith.constant 0 : i32
    %c0_i32_1 = arith.constant 0 : i32
    return %c0_i32, %c0_i32_0 : i32, i32
  }
  func.func @transform_19(%arg0: i32) -> (i32, i32) {
    %c0_i32 = arith.constant 0 : i32
    %c0_i32_0 = arith.constant 0 : i32
    %c0_i32_1 = arith.constant 0 : i32
    return %c0_i32, %c0_i32_0 : i32, i32
  }
  func.func @transform_20(%arg0: i32) -> (i32, i32) {
    %c0_i32 = arith.constant 0 : i32
    %c0_i32_0 = arith.constant 0 : i32
    %c0_i32_1 = arith.constant 0 : i32
    return %c0_i32, %c0_i32_0 : i32, i32
  }
  func.func @transform_21(%arg0: i32) -> (i32, i32, i32) {
    %c0_i32 = arith.constant 0 : i32
    %c0_i32_0 = arith.constant 0 : i32
    %c0_i32_1 = arith.constant 0 : i32
    return %arg0, %c0_i32, %c0_i32_0 : i32, i32, i32
  }
}

</mosaic_0001>

<llo_original>
// kernel: tpu_custom_call.1
$region0: #{tpu_custom_call.1}
  #allocation0 [shape = 'u32[]', space=smem, size = 0x4, offset = 0x4, fixed_abs, tag = 'smem constant byte address 0x4 - core index']
  #allocation1 [shape = 'u32[144,128]{1,0:T(1,128)}', space=vmem, size = 0x12000, scoped, tag = 'internal scratch']
  %s0 = inlined_call_operand.vmem [shape: f32[2,8,32], index: 0, kind: input, shape index: {}]
  %s1 = inlined_call_operand.hbm [shape: f32[1,8,32], index: 1, kind: input, shape index: {}]
  %s2 = inlined_call_operand.vmem [shape: f32[1,32], index: 2, kind: input, shape index: {}]
  %s3 = inlined_call_operand.vmem [shape: f32[1,32], index: 3, kind: input, shape index: {}]
  %s4 = inlined_call_operand.vmem [shape: f32[2,1,8], index: 4, kind: input, shape index: {}]
  %s5 = inlined_call_operand.vmem [shape: bf16[32,32], index: 5, kind: input, shape index: {}]
  %s6 = inlined_call_operand.vmem [shape: f32[1,32], index: 6, kind: input, shape index: {}]
  %s7 = inlined_call_operand.vmem [shape: bf16[32,32], index: 7, kind: input, shape index: {}]
  %s8 = inlined_call_operand.vmem [shape: f32[1,32], index: 8, kind: input, shape index: {}]
  %s9 = inlined_call_operand.hbm [shape: bf16[32,32], index: 9, kind: input, shape index: {}]
  %s10 = inlined_call_operand.vmem [shape: f32[1,32], index: 10, kind: input, shape index: {}]
  %s11 = inlined_call_operand.hbm [shape: bf16[32,32], index: 11, kind: input, shape index: {}]
  %s12 = inlined_call_operand.vmem [shape: f32[1,32], index: 12, kind: input, shape index: {}]
  %s13 = inlined_call_operand.vmem [shape: f32[1,32], index: 13, kind: input, shape index: {}]
  %s14 = inlined_call_operand.vmem [shape: f32[1,32], index: 14, kind: input, shape index: {}]
  %s15 = inlined_call_operand.hbm [shape: bf16[32,64], index: 15, kind: input, shape index: {}]
  %s16 = inlined_call_operand.vmem [shape: f32[1,64], index: 16, kind: input, shape index: {}]
  %s17 = inlined_call_operand.vmem [shape: bf16[64,32], index: 17, kind: input, shape index: {}]
  %s18 = inlined_call_operand.vmem [shape: f32[1,32], index: 18, kind: input, shape index: {}]
  %s19 = inlined_call_operand.vmem [shape: f32[1,32], index: 19, kind: input, shape index: {}]
  %s20 = inlined_call_operand.vmem [shape: f32[1,32], index: 20, kind: input, shape index: {}]
  %s21 = inlined_call_operand.hbm [shape: f32[2,8,32], index: 21, kind: output, shape index: {}]
  %s22 = sld [smem:[#allocation0]]
  $region133: #{tpu_custom_call.1} parent=0
    _
  %s24 = ssub.s32 1, %s22
  %s25 = scalar_select 0, %s24, %s22
  $region1: #{tpu_custom_call.1} parent=0
    #allocation2 [shape = 'u8[4096]{0}', space=vmem, size = 0x1000, scoped, tag = 'input window, operand 1, single buffered']
    #allocation3 [shape = 's32[2]{0}', space=sflag, size = 0x8, scoped, tag = 'scoped memory for tpu_custom_call.1']
    #allocation4 [shape = 's32[2]{0}', space=sflag, size = 0x8, scoped, tag = 'scoped memory for tpu_custom_call.1']
    #allocation5 [shape = 'u8[8192]{0}', space=vmem, size = 0x2000, scoped, tag = 'input window, operand 9, single buffered']
    #allocation6 [shape = 's32[1]{0}', space=sflag, size = 0x4, scoped, tag = 'scoped memory for tpu_custom_call.1']
    #allocation7 [shape = 'u8[8192]{0}', space=vmem, size = 0x2000, scoped, tag = 'input window, operand 11, single buffered']
    #allocation8 [shape = 'u8[8192]{0}', space=vmem, size = 0x2000, scoped, tag = 'input window, operand 15, single buffered']
    #allocation9 [shape = 's32[1]{0}', space=sflag, size = 0x4, scoped, tag = 'scoped memory for tpu_custom_call.1']
    #allocation10 [shape = 'u8[8192]{0}', space=vmem, size = 0x2000, scoped, tag = 'output window, operand 0']
    %26 = vsyncpa [#allocation3], 0
    %27 = vsyncpa [#allocation6], 0
    %28 = vsyncpa [#allocation9], 0
    %29 = vsyncpa [#allocation4], 0
    %s30 = scalar_lea.sflag [#allocation4], 1
    %31 = vsyncpa %s30, 0
    loop: start=0, step=1, limit=4
    $region2: #{tpu_custom_call.1} parent=1 // loop_pre_header
      _
    $region3: #{tpu_custom_call.1} parent=1 // loop_header
      %s33 = sphi 0, %s37
      %p34 = scmp.ge.s32.totalorder %s33, 4
      %s43 = sphi 0, %s45
      %s46 = sphi 0, %s43
      %s47 = sphi 0, %s46
      %s63 = sphi 0, %s47
      %s67 = sphi 0, %s67
      %s69 = sphi 0, %s67
      %s70 = sphi 0, %s69
      %s84 = sphi 0, %s70
      %s88 = sphi 0, %s88
      %s90 = sphi 0, %s88
      %s91 = sphi 0, %s90
      %s105 = sphi 0, %s91
      %s109 = sphi 0, %s109
      %s111 = sphi 0, %s109
      %s112 = sphi 0, %s111
      %s126 = sphi 0, %s112
      %s132 = sphi 0, %s134
      %s135 = sphi 0, %s132
      %s136 = sphi 0, %s135
      %s152 = sphi 0, %s136
      %s156 = sphi 0, %s156
      %s158 = sphi 0, %s156
      %s159 = sphi 0, %s158
      %s173 = sphi 0, %s159
      %s177 = sphi 0, %s177
      %s179 = sphi 0, %s177
      %s180 = sphi 0, %s179
      %s194 = sphi 0, %s180
      %s198 = sphi 0, %s198
      %s200 = sphi 0, %s198
      %s201 = sphi 0, %s200
      %s215 = sphi 0, %s201
      %s219 = sphi 0, %s219
      %s221 = sphi 0, %s219
      %s222 = sphi 0, %s221
      %s236 = sphi 0, %s222
      %s240 = sphi 0, %s240
      %s242 = sphi 0, %s240
      %s243 = sphi 0, %s242
      %s257 = sphi 0, %s243
      %s261 = sphi 0, %s261
      %s263 = sphi 0, %s261
      %s264 = sphi 0, %s263
      %s278 = sphi 0, %s264
      %s282 = sphi 0, %s282
      %s284 = sphi 0, %s282
      %s285 = sphi 0, %s284
      %s299 = sphi 0, %s285
      %s303 = sphi 0, %s303
      %s305 = sphi 0, %s303
      %s306 = sphi 0, %s305
      %s320 = sphi 0, %s306
      %s324 = sphi 0, %s324
      %s326 = sphi 0, %s324
      %s327 = sphi 0, %s326
      %s341 = sphi 0, %s327
      %s345 = sphi 0, %s345
      %s347 = sphi 0, %s345
      %s348 = sphi 0, %s347
      %s362 = sphi 0, %s348
      %s366 = sphi 0, %s366
      %s368 = sphi 0, %s366
      %s369 = sphi 0, %s368
      %s383 = sphi 0, %s369
      %s387 = sphi 0, %s387
      %s389 = sphi 0, %s387
      %s390 = sphi 0, %s389
      %s404 = sphi 0, %s390
      %s408 = sphi 0, %s408
      %s410 = sphi 0, %s408
      %s411 = sphi 0, %s410
      %s425 = sphi 0, %s411
      %s429 = sphi 0, %s429
      %s431 = sphi 0, %s429
      %s432 = sphi 0, %s431
      %s446 = sphi 0, %s432
      %s450 = sphi 0, %s450
      %s452 = sphi 0, %s450
      %s453 = sphi 0, %s452
      %s467 = sphi 0, %s453
      %s471 = sphi 0, %s471
      %s473 = sphi 0, %s471
      %s474 = sphi 0, %s473
      %s488 = sphi 0, %s474
      %s494 = sphi 0, %s496
      %s497 = sphi 0, %s494
      %s498 = sphi 0, %s497
      %s514 = sphi 0, %s498
    $region4: #{tpu_custom_call.1} parent=1 // loop_header_branch
      %36 = sbr.rel (%p34) target = $region8
    $region5: #{tpu_custom_call.1} parent=1 // loop_body
      %s38 = ssub.s32 %s33, 1
      %s39 = ssub.s32 %s33, 2
      %s40 = sadd.s32 %s33, 1
      %s41 = ssub.s32 %s33, %s40
      %p42 = scmp.eq.s32.totalorder %s41, 0
      %s44 = sadd.s32 %s43, 1
      %s45 = scalar_select %p42, %s43, %s44
      %p48 = pneg %p42
      %p49 = scmp.eq.s32.totalorder %s33, 1
      %p50 = por %p48, %p49
      %p51 = scmp.ne.s32.totalorder %s43, %s46
      %p52 = scmp.eq.s32.totalorder %s33, 0
      %p53 = por %p51, %p52
      %p54 = scmp.ne.s32.totalorder %s43, %s46
      %p55 = scmp.eq.s32.totalorder %s38, 1
      %p56 = por %p54, %p55
      %p57 = scmp.ne.s32.totalorder %s46, %s47
      %p58 = scmp.eq.s32.totalorder %s38, 0
      %p59 = por %p57, %p58
      %p60 = scmp.ne.s32.totalorder %s46, %s47
      %p61 = scmp.eq.s32.totalorder %s39, 1
      %p62 = por %p60, %p61
      %p64 = scmp.ne.s32.totalorder %s47, %s63
      %p65 = scmp.eq.s32.totalorder %s39, 0
      %p66 = por %p64, %p65
      %s68 = sadd.s32 %s67, 1
      %p71 = scmp.eq.s32.totalorder %s33, 1
      %p72 = scmp.ne.s32.totalorder %s67, %s69
      %p73 = scmp.eq.s32.totalorder %s33, 0
      %p74 = por %p72, %p73
      %p75 = scmp.ne.s32.totalorder %s67, %s69
      %p76 = scmp.eq.s32.totalorder %s38, 1
      %p77 = por %p75, %p76
      %p78 = scmp.ne.s32.totalorder %s69, %s70
      %p79 = scmp.eq.s32.totalorder %s38, 0
      %p80 = por %p78, %p79
      %p81 = scmp.ne.s32.totalorder %s69, %s70
      %p82 = scmp.eq.s32.totalorder %s39, 1
      %p83 = por %p81, %p82
      %p85 = scmp.ne.s32.totalorder %s70, %s84
      %p86 = scmp.eq.s32.totalorder %s39, 0
      %p87 = por %p85, %p86
      %s89 = sadd.s32 %s88, 1
      %p92 = scmp.eq.s32.totalorder %s33, 1
      %p93 = scmp.ne.s32.totalorder %s88, %s90
      %p94 = scmp.eq.s32.totalorder %s33, 0
      %p95 = por %p93, %p94
      %p96 = scmp.ne.s32.totalorder %s88, %s90
      %p97 = scmp.eq.s32.totalorder %s38, 1
      %p98 = por %p96, %p97
      %p99 = scmp.ne.s32.totalorder %s90, %s91
      %p100 = scmp.eq.s32.totalorder %s38, 0
      %p101 = por %p99, %p100
      %p102 = scmp.ne.s32.totalorder %s90, %s91
      %p103 = scmp.eq.s32.totalorder %s39, 1
      %p104 = por %p102, %p103
      %p106 = scmp.ne.s32.totalorder %s91, %s105
      %p107 = scmp.eq.s32.totalorder %s39, 0
      %p108 = por %p106, %p107
      %s110 = sadd.s32 %s109, 1
      %p113 = scmp.eq.s32.totalorder %s33, 1
      %p114 = scmp.ne.s32.totalorder %s109, %s111
      %p115 = scmp.eq.s32.totalorder %s33, 0
      %p116 = por %p114, %p115
      %p117 = scmp.ne.s32.totalorder %s109, %s111
      %p118 = scmp.eq.s32.totalorder %s38, 1
      %p119 = por %p117, %p118
      %p120 = scmp.ne.s32.totalorder %s111, %s112
      %p121 = scmp.eq.s32.totalorder %s38, 0
      %p122 = por %p120, %p121
      %p123 = scmp.ne.s32.totalorder %s111, %s112
      %p124 = scmp.eq.s32.totalorder %s39, 1
      %p125 = por %p123, %p124
      %p127 = scmp.ne.s32.totalorder %s112, %s126
      %p128 = scmp.eq.s32.totalorder %s39, 0
      %p129 = por %p127, %p128
      %s130 = ssub.s32 %s33, %s40
      %p131 = scmp.eq.s32.totalorder %s130, 0
      %s133 = sadd.s32 %s132, 1
      %s134 = scalar_select %p131, %s132, %s133
      %p137 = pneg %p131
      %p138 = scmp.eq.s32.totalorder %s33, 1
      %p139 = por %p137, %p138
      %p140 = scmp.ne.s32.totalorder %s132, %s135
      %p141 = scmp.eq.s32.totalorder %s33, 0
      %p142 = por %p140, %p141
      %p143 = scmp.ne.s32.totalorder %s132, %s135
      %p144 = scmp.eq.s32.totalorder %s38, 1
      %p145 = por %p143, %p144
      %p146 = scmp.ne.s32.totalorder %s135, %s136
      %p147 = scmp.eq.s32.totalorder %s38, 0
      %p148 = por %p146, %p147
      %p149 = scmp.ne.s32.totalorder %s135, %s136
      %p150 = scmp.eq.s32.totalorder %s39, 1
      %p151 = por %p149, %p150
      %p153 = scmp.ne.s32.totalorder %s136, %s152
      %p154 = scmp.eq.s32.totalorder %s39, 0
      %p155 = por %p153, %p154
      %s157 = sadd.s32 %s156, 1
      %p160 = scmp.eq.s32.totalorder %s33, 1
      %p161 = scmp.ne.s32.totalorder %s156, %s158
      %p162 = scmp.eq.s32.totalorder %s33, 0
      %p163 = por %p161, %p162
      %p164 = scmp.ne.s32.totalorder %s156, %s158
      %p165 = scmp.eq.s32.totalorder %s38, 1
      %p166 = por %p164, %p165
      %p167 = scmp.ne.s32.totalorder %s158, %s159
      %p168 = scmp.eq.s32.totalorder %s38, 0
      %p169 = por %p167, %p168
      %p170 = scmp.ne.s32.totalorder %s158, %s159
      %p171 = scmp.eq.s32.totalorder %s39, 1
      %p172 = por %p170, %p171
      %p174 = scmp.ne.s32.totalorder %s159, %s173
      %p175 = scmp.eq.s32.totalorder %s39, 0
      %p176 = por %p174, %p175
      %s178 = sadd.s32 %s177, 1
      %p181 = scmp.eq.s32.totalorder %s33, 1
      %p182 = scmp.ne.s32.totalorder %s177, %s179
      %p183 = scmp.eq.s32.totalorder %s33, 0
      %p184 = por %p182, %p183
      %p185 = scmp.ne.s32.totalorder %s177, %s179
      %p186 = scmp.eq.s32.totalorder %s38, 1
      %p187 = por %p185, %p186
      %p188 = scmp.ne.s32.totalorder %s179, %s180
      %p189 = scmp.eq.s32.totalorder %s38, 0
      %p190 = por %p188, %p189
      %p191 = scmp.ne.s32.totalorder %s179, %s180
      %p192 = scmp.eq.s32.totalorder %s39, 1
      %p193 = por %p191, %p192
      %p195 = scmp.ne.s32.totalorder %s180, %s194
      %p196 = scmp.eq.s32.totalorder %s39, 0
      %p197 = por %p195, %p196
      %s199 = sadd.s32 %s198, 1
      %p202 = scmp.eq.s32.totalorder %s33, 1
      %p203 = scmp.ne.s32.totalorder %s198, %s200
      %p204 = scmp.eq.s32.totalorder %s33, 0
      %p205 = por %p203, %p204
      %p206 = scmp.ne.s32.totalorder %s198, %s200
      %p207 = scmp.eq.s32.totalorder %s38, 1
      %p208 = por %p206, %p207
      %p209 = scmp.ne.s32.totalorder %s200, %s201
      %p210 = scmp.eq.s32.totalorder %s38, 0
      %p211 = por %p209, %p210
      %p212 = scmp.ne.s32.totalorder %s200, %s201
      %p213 = scmp.eq.s32.totalorder %s39, 1
      %p214 = por %p212, %p213
      %p216 = scmp.ne.s32.totalorder %s201, %s215
      %p217 = scmp.eq.s32.totalorder %s39, 0
      %p218 = por %p216, %p217
      %s220 = sadd.s32 %s219, 1
      %p223 = scmp.eq.s32.totalorder %s33, 1
      %p224 = scmp.ne.s32.totalorder %s219, %s221
      %p225 = scmp.eq.s32.totalorder %s33, 0
      %p226 = por %p224, %p225
      %p227 = scmp.ne.s32.totalorder %s219, %s221
      %p228 = scmp.eq.s32.totalorder %s38, 1
      %p229 = por %p227, %p228
      %p230 = scmp.ne.s32.totalorder %s221, %s222
      %p231 = scmp.eq.s32.totalorder %s38, 0
      %p232 = por %p230, %p231
      %p233 = scmp.ne.s32.totalorder %s221, %s222
      %p234 = scmp.eq.s32.totalorder %s39, 1
      %p235 = por %p233, %p234
      %p237 = scmp.ne.s32.totalorder %s222, %s236
      %p238 = scmp.eq.s32.totalorder %s39, 0
      %p239 = por %p237, %p238
      %s241 = sadd.s32 %s240, 1
      %p244 = scmp.eq.s32.totalorder %s33, 1
      %p245 = scmp.ne.s32.totalorder %s240, %s242
      %p246 = scmp.eq.s32.totalorder %s33, 0
      %p247 = por %p245, %p246
      %p248 = scmp.ne.s32.totalorder %s240, %s242
      %p249 = scmp.eq.s32.totalorder %s38, 1
      %p250 = por %p248, %p249
      %p251 = scmp.ne.s32.totalorder %s242, %s243
      %p252 = scmp.eq.s32.totalorder %s38, 0
      %p253 = por %p251, %p252
      %p254 = scmp.ne.s32.totalorder %s242, %s243
      %p255 = scmp.eq.s32.totalorder %s39, 1
      %p256 = por %p254, %p255
      %p258 = scmp.ne.s32.totalorder %s243, %s257
      %p259 = scmp.eq.s32.totalorder %s39, 0
      %p260 = por %p258, %p259
      %s262 = sadd.s32 %s261, 1
      %p265 = scmp.eq.s32.totalorder %s33, 1
      %p266 = scmp.ne.s32.totalorder %s261, %s263
      %p267 = scmp.eq.s32.totalorder %s33, 0
      %p268 = por %p266, %p267
      %p269 = scmp.ne.s32.totalorder %s261, %s263
      %p270 = scmp.eq.s32.totalorder %s38, 1
      %p271 = por %p269, %p270
      %p272 = scmp.ne.s32.totalorder %s263, %s264
      %p273 = scmp.eq.s32.totalorder %s38, 0
      %p274 = por %p272, %p273
      %p275 = scmp.ne.s32.totalorder %s263, %s264
      %p276 = scmp.eq.s32.totalorder %s39, 1
      %p277 = por %p275, %p276
      %p279 = scmp.ne.s32.totalorder %s264, %s278
      %p280 = scmp.eq.s32.totalorder %s39, 0
      %p281 = por %p279, %p280
      %s283 = sadd.s32 %s282, 1
      %p286 = scmp.eq.s32.totalorder %s33, 1
      %p287 = scmp.ne.s32.totalorder %s282, %s284
      %p288 = scmp.eq.s32.totalorder %s33, 0
      %p289 = por %p287, %p288
      %p290 = scmp.ne.s32.totalorder %s282, %s284
      %p291 = scmp.eq.s32.totalorder %s38, 1
      %p292 = por %p290, %p291
      %p293 = scmp.ne.s32.totalorder %s284, %s285
      %p294 = scmp.eq.s32.totalorder %s38, 0
      %p295 = por %p293, %p294
      %p296 = scmp.ne.s32.totalorder %s284, %s285
      %p297 = scmp.eq.s32.totalorder %s39, 1
      %p298 = por %p296, %p297
      %p300 = scmp.ne.s32.totalorder %s285, %s299
      %p301 = scmp.eq.s32.totalorder %s39, 0
      %p302 = por %p300, %p301
      %s304 = sadd.s32 %s303, 1
      %p307 = scmp.eq.s32.totalorder %s33, 1
      %p308 = scmp.ne.s32.totalorder %s303, %s305
      %p309 = scmp.eq.s32.totalorder %s33, 0
      %p310 = por %p308, %p309
      %p311 = scmp.ne.s32.totalorder %s303, %s305
      %p312 = scmp.eq.s32.totalorder %s38, 1
      %p313 = por %p311, %p312
      %p314 = scmp.ne.s32.totalorder %s305, %s306
      %p315 = scmp.eq.s32.totalorder %s38, 0
      %p316 = por %p314, %p315
      %p317 = scmp.ne.s32.totalorder %s305, %s306
      %p318 = scmp.eq.s32.totalorder %s39, 1
      %p319 = por %p317, %p318
      %p321 = scmp.ne.s32.totalorder %s306, %s320
      %p322 = scmp.eq.s32.totalorder %s39, 0
      %p323 = por %p321, %p322
      %s325 = sadd.s32 %s324, 1
      %p328 = scmp.eq.s32.totalorder %s33, 1
      %p329 = scmp.ne.s32.totalorder %s324, %s326
      %p330 = scmp.eq.s32.totalorder %s33, 0
      %p331 = por %p329, %p330
      %p332 = scmp.ne.s32.totalorder %s324, %s326
      %p333 = scmp.eq.s32.totalorder %s38, 1
      %p334 = por %p332, %p333
      %p335 = scmp.ne.s32.totalorder %s326, %s327
      %p336 = scmp.eq.s32.totalorder %s38, 0
      %p337 = por %p335, %p336
      %p338 = scmp.ne.s32.totalorder %s326, %s327
      %p339 = scmp.eq.s32.totalorder %s39, 1
      %p340 = por %p338, %p339
      %p342 = scmp.ne.s32.totalorder %s327, %s341
      %p343 = scmp.eq.s32.totalorder %s39, 0
      %p344 = por %p342, %p343
      %s346 = sadd.s32 %s345, 1
      %p349 = scmp.eq.s32.totalorder %s33, 1
      %p350 = scmp.ne.s32.totalorder %s345, %s347
      %p351 = scmp.eq.s32.totalorder %s33, 0
      %p352 = por %p350, %p351
      %p353 = scmp.ne.s32.totalorder %s345, %s347
      %p354 = scmp.eq.s32.totalorder %s38, 1
      %p355 = por %p353, %p354
      %p356 = scmp.ne.s32.totalorder %s347, %s348
      %p357 = scmp.eq.s32.totalorder %s38, 0
      %p358 = por %p356, %p357
      %p359 = scmp.ne.s32.totalorder %s347, %s348
      %p360 = scmp.eq.s32.totalorder %s39, 1
      %p361 = por %p359, %p360
      %p363 = scmp.ne.s32.totalorder %s348, %s362
      %p364 = scmp.eq.s32.totalorder %s39, 0
      %p365 = por %p363, %p364
      %s367 = sadd.s32 %s366, 1
      %p370 = scmp.eq.s32.totalorder %s33, 1
      %p371 = scmp.ne.s32.totalorder %s366, %s368
      %p372 = scmp.eq.s32.totalorder %s33, 0
      %p373 = por %p371, %p372
      %p374 = scmp.ne.s32.totalorder %s366, %s368
      %p375 = scmp.eq.s32.totalorder %s38, 1
      %p376 = por %p374, %p375
      %p377 = scmp.ne.s32.totalorder %s368, %s369
      %p378 = scmp.eq.s32.totalorder %s38, 0
      %p379 = por %p377, %p378
      %p380 = scmp.ne.s32.totalorder %s368, %s369
      %p381 = scmp.eq.s32.totalorder %s39, 1
      %p382 = por %p380, %p381
      %p384 = scmp.ne.s32.totalorder %s369, %s383
      %p385 = scmp.eq.s32.totalorder %s39, 0
      %p386 = por %p384, %p385
      %s388 = sadd.s32 %s387, 1
      %p391 = scmp.eq.s32.totalorder %s33, 1
      %p392 = scmp.ne.s32.totalorder %s387, %s389
      %p393 = scmp.eq.s32.totalorder %s33, 0
      %p394 = por %p392, %p393
      %p395 = scmp.ne.s32.totalorder %s387, %s389
      %p396 = scmp.eq.s32.totalorder %s38, 1
      %p397 = por %p395, %p396
      %p398 = scmp.ne.s32.totalorder %s389, %s390
      %p399 = scmp.eq.s32.totalorder %s38, 0
      %p400 = por %p398, %p399
      %p401 = scmp.ne.s32.totalorder %s389, %s390
      %p402 = scmp.eq.s32.totalorder %s39, 1
      %p403 = por %p401, %p402
      %p405 = scmp.ne.s32.totalorder %s390, %s404
      %p406 = scmp.eq.s32.totalorder %s39, 0
      %p407 = por %p405, %p406
      %s409 = sadd.s32 %s408, 1
      %p412 = scmp.eq.s32.totalorder %s33, 1
      %p413 = scmp.ne.s32.totalorder %s408, %s410
      %p414 = scmp.eq.s32.totalorder %s33, 0
      %p415 = por %p413, %p414
      %p416 = scmp.ne.s32.totalorder %s408, %s410
      %p417 = scmp.eq.s32.totalorder %s38, 1
      %p418 = por %p416, %p417
      %p419 = scmp.ne.s32.totalorder %s410, %s411
      %p420 = scmp.eq.s32.totalorder %s38, 0
      %p421 = por %p419, %p420
      %p422 = scmp.ne.s32.totalorder %s410, %s411
      %p423 = scmp.eq.s32.totalorder %s39, 1
      %p424 = por %p422, %p423
      %p426 = scmp.ne.s32.totalorder %s411, %s425
      %p427 = scmp.eq.s32.totalorder %s39, 0
      %p428 = por %p426, %p427
      %s430 = sadd.s32 %s429, 1
      %p433 = scmp.eq.s32.totalorder %s33, 1
      %p434 = scmp.ne.s32.totalorder %s429, %s431
      %p435 = scmp.eq.s32.totalorder %s33, 0
      %p436 = por %p434, %p435
      %p437 = scmp.ne.s32.totalorder %s429, %s431
      %p438 = scmp.eq.s32.totalorder %s38, 1
      %p439 = por %p437, %p438
      %p440 = scmp.ne.s32.totalorder %s431, %s432
      %p441 = scmp.eq.s32.totalorder %s38, 0
      %p442 = por %p440, %p441
      %p443 = scmp.ne.s32.totalorder %s431, %s432
      %p444 = scmp.eq.s32.totalorder %s39, 1
      %p445 = por %p443, %p444
      %p447 = scmp.ne.s32.totalorder %s432, %s446
      %p448 = scmp.eq.s32.totalorder %s39, 0
      %p449 = por %p447, %p448
      %s451 = sadd.s32 %s450, 1
      %p454 = scmp.eq.s32.totalorder %s33, 1
      %p455 = scmp.ne.s32.totalorder %s450, %s452
      %p456 = scmp.eq.s32.totalorder %s33, 0
      %p457 = por %p455, %p456
      %p458 = scmp.ne.s32.totalorder %s450, %s452
      %p459 = scmp.eq.s32.totalorder %s38, 1
      %p460 = por %p458, %p459
      %p461 = scmp.ne.s32.totalorder %s452, %s453
      %p462 = scmp.eq.s32.totalorder %s38, 0
      %p463 = por %p461, %p462
      %p464 = scmp.ne.s32.totalorder %s452, %s453
      %p465 = scmp.eq.s32.totalorder %s39, 1
      %p466 = por %p464, %p465
      %p468 = scmp.ne.s32.totalorder %s453, %s467
      %p469 = scmp.eq.s32.totalorder %s39, 0
      %p470 = por %p468, %p469
      %s472 = sadd.s32 %s471, 1
      %p475 = scmp.eq.s32.totalorder %s33, 1
      %p476 = scmp.ne.s32.totalorder %s471, %s473
      %p477 = scmp.eq.s32.totalorder %s33, 0
      %p478 = por %p476, %p477
      %p479 = scmp.ne.s32.totalorder %s471, %s473
      %p480 = scmp.eq.s32.totalorder %s38, 1
      %p481 = por %p479, %p480
      %p482 = scmp.ne.s32.totalorder %s473, %s474
      %p483 = scmp.eq.s32.totalorder %s38, 0
      %p484 = por %p482, %p483
      %p485 = scmp.ne.s32.totalorder %s473, %s474
      %p486 = scmp.eq.s32.totalorder %s39, 1
      %p487 = por %p485, %p486
      %p489 = scmp.ne.s32.totalorder %s474, %s488
      %p490 = scmp.eq.s32.totalorder %s39, 0
      %p491 = por %p489, %p490
      %s492 = ssub.s32 %s33, %s40
      %p493 = scmp.eq.s32.totalorder %s492, 0
      %s495 = sadd.s32 %s494, 1
      %s496 = scalar_select %p493, %s494, %s495
      %p499 = pneg %p493
      %p500 = scmp.eq.s32.totalorder %s33, 1
      %p501 = por %p499, %p500
      %p502 = scmp.ne.s32.totalorder %s494, %s497
      %p503 = scmp.eq.s32.totalorder %s33, 0
      %p504 = por %p502, %p503
      %p505 = scmp.ne.s32.totalorder %s494, %s497
      %p506 = scmp.eq.s32.totalorder %s38, 1
      %p507 = por %p505, %p506
      %p508 = scmp.ne.s32.totalorder %s497, %s498
      %p509 = scmp.eq.s32.totalorder %s38, 0
      %p510 = por %p508, %p509
      %p511 = scmp.ne.s32.totalorder %s497, %s498
      %p512 = scmp.eq.s32.totalorder %s39, 1
      %p513 = por %p511, %p512
      %p515 = scmp.ne.s32.totalorder %s498, %s514
      %p516 = scmp.eq.s32.totalorder %s39, 0
      %p517 = por %p515, %p516
      %p518 = scmp.le.s32.totalorder 1, %s33
      %p519 = scmp.lt.s32.totalorder %s33, 3
      %p520 = pnand %p518, %p519
      %p521 = pneg %p520
      // Predicated region
      $region9: #{tpu_custom_call.1} parent=5 // pred_check
        _
      $region10: #{tpu_custom_call.1} parent=5 // pred_check_branch
        %523 = sbr.rel (%p520) target = $region12
      $region11: #{tpu_custom_call.1} parent=5 // pred_region
        %s524 = ssub.s32 %s33, 1
        // Predicated region
        $region13: #{tpu_custom_call.1} parent=11 // pred_check
          %p525 = pneg %p80
        $region14: #{tpu_custom_call.1} parent=11 // pred_check_branch
          %527 = sbr.rel (%p525) target = $region16
        $region15: #{tpu_custom_call.1} parent=11 // pred_region
          %s529 = ssub.s32 128, 128
          %530 = vsyncadd [#allocation3], %s529
          %s532 = sshll.u32 [#allocation2], 4
          %s533 = int_to_ptr.vmem [resolvable:$true] %s532
          %535 = dma.hbm_to_vmem [thread:$0]  %s1, 128, %s533, [#allocation3]
        $region16: #{tpu_custom_call.1} parent=11 // pred_fallthru
          _
        // Predicated region
        $region17: #{tpu_custom_call.1} parent=11 // pred_check
          %p536 = pneg %p101
        $region18: #{tpu_custom_call.1} parent=11 // pred_check_branch
          %538 = sbr.rel (%p536) target = $region20
        $region19: #{tpu_custom_call.1} parent=11 // pred_region
          _
        $region20: #{tpu_custom_call.1} parent=11 // pred_fallthru
          _
        // Predicated region
        $region21: #{tpu_custom_call.1} parent=11 // pred_check
          %p539 = pneg %p122
        $region22: #{tpu_custom_call.1} parent=11 // pred_check_branch
          %541 = sbr.rel (%p539) target = $region24
        $region23: #{tpu_custom_call.1} parent=11 // pred_region
          _
        $region24: #{tpu_custom_call.1} parent=11 // pred_fallthru
          _
        // Predicated region
        $region25: #{tpu_custom_call.1} parent=11 // pred_check
          %p542 = pneg %p169
        $region26: #{tpu_custom_call.1} parent=11 // pred_check_branch
          %544 = sbr.rel (%p542) target = $region28
        $region27: #{tpu_custom_call.1} parent=11 // pred_region
          _
        $region28: #{tpu_custom_call.1} parent=11 // pred_fallthru
          _
        // Predicated region
        $region29: #{tpu_custom_call.1} parent=11 // pred_check
          %p545 = pneg %p190
        $region30: #{tpu_custom_call.1} parent=11 // pred_check_branch
          %547 = sbr.rel (%p545) target = $region32
        $region31: #{tpu_custom_call.1} parent=11 // pred_region
          _
        $region32: #{tpu_custom_call.1} parent=11 // pred_fallthru
          _
        // Predicated region
        $region33: #{tpu_custom_call.1} parent=11 // pred_check
          %p548 = pneg %p211
        $region34: #{tpu_custom_call.1} parent=11 // pred_check_branch
          %550 = sbr.rel (%p548) target = $region36
        $region35: #{tpu_custom_call.1} parent=11 // pred_region
          _
        $region36: #{tpu_custom_call.1} parent=11 // pred_fallthru
          _
        // Predicated region
        $region37: #{tpu_custom_call.1} parent=11 // pred_check
          %p551 = pneg %p232
        $region38: #{tpu_custom_call.1} parent=11 // pred_check_branch
          %553 = sbr.rel (%p551) target = $region40
        $region39: #{tpu_custom_call.1} parent=11 // pred_region
          _
        $region40: #{tpu_custom_call.1} parent=11 // pred_fallthru
          _
        // Predicated region
        $region41: #{tpu_custom_call.1} parent=11 // pred_check
          %p554 = pneg %p253
        $region42: #{tpu_custom_call.1} parent=11 // pred_check_branch
          %556 = sbr.rel (%p554) target = $region44
        $region43: #{tpu_custom_call.1} parent=11 // pred_region
          %s558 = ssub.s32 256, 256
          %559 = vsyncadd [#allocation6], %s558
          %s560 = sshll.u32 [#allocation5], 4
          %s561 = int_to_ptr.vmem [resolvable:$true] %s560
          %566 = dma.hbm_to_vmem [thread:$0]  %s9, 256, %s561, [#allocation6], 64, 64, 4
        $region44: #{tpu_custom_call.1} parent=11 // pred_fallthru
          _
        // Predicated region
        $region45: #{tpu_custom_call.1} parent=11 // pred_check
          %p567 = pneg %p274
        $region46: #{tpu_custom_call.1} parent=11 // pred_check_branch
          %569 = sbr.rel (%p567) target = $region48
        $region47: #{tpu_custom_call.1} parent=11 // pred_region
          _
        $region48: #{tpu_custom_call.1} parent=11 // pred_fallthru
          _
        // Predicated region
        $region49: #{tpu_custom_call.1} parent=11 // pred_check
          %p570 = pneg %p295
        $region50: #{tpu_custom_call.1} parent=11 // pred_check_branch
          %572 = sbr.rel (%p570) target = $region52
        $region51: #{tpu_custom_call.1} parent=11 // pred_region
          %s574 = ssub.s32 256, 256
          %575 = vsyncadd [#allocation6], %s574
          %s576 = sshll.u32 [#allocation7], 4
          %s577 = int_to_ptr.vmem [resolvable:$true] %s576
          %582 = dma.hbm_to_vmem [thread:$0]  %s11, 256, %s577, [#allocation6], 64, 64, 4
        $region52: #{tpu_custom_call.1} parent=11 // pred_fallthru
          _
        // Predicated region
        $region53: #{tpu_custom_call.1} parent=11 // pred_check
          %p583 = pneg %p316
        $region54: #{tpu_custom_call.1} parent=11 // pred_check_branch
          %585 = sbr.rel (%p583) target = $region56
        $region55: #{tpu_custom_call.1} parent=11 // pred_region
          _
        $region56: #{tpu_custom_call.1} parent=11 // pred_fallthru
          _
        // Predicated region
        $region57: #{tpu_custom_call.1} parent=11 // pred_check
          %p586 = pneg %p337
        $region58: #{tpu_custom_call.1} parent=11 // pred_check_branch
          %588 = sbr.rel (%p586) target = $region60
        $region59: #{tpu_custom_call.1} parent=11 // pred_region
          _
        $region60: #{tpu_custom_call.1} parent=11 // pred_fallthru
          _
        // Predicated region
        $region61: #{tpu_custom_call.1} parent=11 // pred_check
          %p589 = pneg %p358
        $region62: #{tpu_custom_call.1} parent=11 // pred_check_branch
          %591 = sbr.rel (%p589) target = $region64
        $region63: #{tpu_custom_call.1} parent=11 // pred_region
          _
        $region64: #{tpu_custom_call.1} parent=11 // pred_fallthru
          _
        // Predicated region
        $region65: #{tpu_custom_call.1} parent=11 // pred_check
          %p592 = pneg %p379
        $region66: #{tpu_custom_call.1} parent=11 // pred_check_branch
          %594 = sbr.rel (%p592) target = $region68
        $region67: #{tpu_custom_call.1} parent=11 // pred_region
          %s596 = ssub.s32 256, 256
          %597 = vsyncadd [#allocation9], %s596
          %s598 = sshll.u32 [#allocation8], 4
          %s599 = int_to_ptr.vmem [resolvable:$true] %s598
          %604 = dma.hbm_to_vmem [thread:$0]  %s15, 256, %s599, [#allocation9], 64, 64, 4
        $region68: #{tpu_custom_call.1} parent=11 // pred_fallthru
          _
        // Predicated region
        $region69: #{tpu_custom_call.1} parent=11 // pred_check
          %p605 = pneg %p400
        $region70: #{tpu_custom_call.1} parent=11 // pred_check_branch
          %607 = sbr.rel (%p605) target = $region72
        $region71: #{tpu_custom_call.1} parent=11 // pred_region
          _
        $region72: #{tpu_custom_call.1} parent=11 // pred_fallthru
          _
        // Predicated region
        $region73: #{tpu_custom_call.1} parent=11 // pred_check
          %p608 = pneg %p421
        $region74: #{tpu_custom_call.1} parent=11 // pred_check_branch
          %610 = sbr.rel (%p608) target = $region76
        $region75: #{tpu_custom_call.1} parent=11 // pred_region
          _
        $region76: #{tpu_custom_call.1} parent=11 // pred_fallthru
          _
        // Predicated region
        $region77: #{tpu_custom_call.1} parent=11 // pred_check
          %p611 = pneg %p442
        $region78: #{tpu_custom_call.1} parent=11 // pred_check_branch
          %613 = sbr.rel (%p611) target = $region80
        $region79: #{tpu_custom_call.1} parent=11 // pred_region
          _
        $region80: #{tpu_custom_call.1} parent=11 // pred_fallthru
          _
        // Predicated region
        $region81: #{tpu_custom_call.1} parent=11 // pred_check
          %p614 = pneg %p463
        $region82: #{tpu_custom_call.1} parent=11 // pred_check_branch
          %616 = sbr.rel (%p614) target = $region84
        $region83: #{tpu_custom_call.1} parent=11 // pred_region
          _
        $region84: #{tpu_custom_call.1} parent=11 // pred_fallthru
          _
        // Predicated region
        $region85: #{tpu_custom_call.1} parent=11 // pred_check
          %p617 = pneg %p484
        $region86: #{tpu_custom_call.1} parent=11 // pred_check_branch
          %619 = sbr.rel (%p617) target = $region88
        $region87: #{tpu_custom_call.1} parent=11 // pred_region
          _
        $region88: #{tpu_custom_call.1} parent=11 // pred_fallthru
          _
      $region12: #{tpu_custom_call.1} parent=5 // pred_fallthru
        _
      %p620 = scmp.lt.s32.totalorder %s33, 2
      // Predicated region
      $region89: #{tpu_custom_call.1} parent=5 // pred_check
        %p621 = pneg %p620
      $region90: #{tpu_custom_call.1} parent=5 // pred_check_branch
        %623 = sbr.rel (%p621) target = $region92
      $region91: #{tpu_custom_call.1} parent=5 // pred_region
        // Predicated region
        $region93: #{tpu_custom_call.1} parent=91 // pred_check
          %p624 = pneg %p53
        $region94: #{tpu_custom_call.1} parent=91 // pred_check_branch
          %626 = sbr.rel (%p624) target = $region96
        $region95: #{tpu_custom_call.1} parent=91 // pred_region
          %p627 = scmp.lt.s32.totalorder %s33, 1
          %s628 = scalar_select %p627, %s33, 1
          %s629 = smul.addr %s628, 8
          %s630 = scalar_lea.vmem %s0, %s629
        $region96: #{tpu_custom_call.1} parent=91 // pred_fallthru
          _
        // Predicated region
        $region97: #{tpu_custom_call.1} parent=91 // pred_check
          %p631 = pneg %p142
        $region98: #{tpu_custom_call.1} parent=91 // pred_check_branch
          %633 = sbr.rel (%p631) target = $region100
        $region99: #{tpu_custom_call.1} parent=91 // pred_region
          %p634 = scmp.lt.s32.totalorder %s33, 1
          %s635 = scalar_select %p634, %s33, 1
          %s636 = scalar_lea.vmem %s4, %s635
        $region100: #{tpu_custom_call.1} parent=91 // pred_fallthru
          _
      $region92: #{tpu_custom_call.1} parent=5 // pred_fallthru
        _
      %p637 = scmp.le.s32.totalorder 1, %s33
      %p638 = scmp.lt.s32.totalorder %s33, 3
      %p639 = pnand %p637, %p638
      %p640 = pneg %p639
      // Predicated region
      $region101: #{tpu_custom_call.1} parent=5 // pred_check
        _
      $region102: #{tpu_custom_call.1} parent=5 // pred_check_branch
        %642 = sbr.rel (%p639) target = $region104
      $region103: #{tpu_custom_call.1} parent=5 // pred_region
        %s643 = ssub.s32 %s33, 1
        // Predicated region
        $region105: #{tpu_custom_call.1} parent=103 // pred_check
          %p644 = pneg %p80
        $region106: #{tpu_custom_call.1} parent=103 // pred_check_branch
          %646 = sbr.rel (%p644) target = $region108
        $region107: #{tpu_custom_call.1} parent=103 // pred_region
          %647 = dma.done [#allocation3], 128
        $region108: #{tpu_custom_call.1} parent=103 // pred_fallthru
          _
        // Predicated region
        $region109: #{tpu_custom_call.1} parent=103 // pred_check
          %p648 = pneg %p253
        $region110: #{tpu_custom_call.1} parent=103 // pred_check_branch
          %650 = sbr.rel (%p648) target = $region112
        $region111: #{tpu_custom_call.1} parent=103 // pred_region
          %651 = dma.done [#allocation6], 256
        $region112: #{tpu_custom_call.1} parent=103 // pred_fallthru
          _
        // Predicated region
        $region113: #{tpu_custom_call.1} parent=103 // pred_check
          %p652 = pneg %p295
        $region114: #{tpu_custom_call.1} parent=103 // pred_check_branch
          %654 = sbr.rel (%p652) target = $region116
        $region115: #{tpu_custom_call.1} parent=103 // pred_region
          %655 = dma.done [#allocation6], 256
        $region116: #{tpu_custom_call.1} parent=103 // pred_fallthru
          _
        // Predicated region
        $region117: #{tpu_custom_call.1} parent=103 // pred_check
          %p656 = pneg %p379
        $region118: #{tpu_custom_call.1} parent=103 // pred_check_branch
          %658 = sbr.rel (%p656) target = $region120
        $region119: #{tpu_custom_call.1} parent=103 // pred_region
          %659 = dma.done [#allocation9], 256
        $region120: #{tpu_custom_call.1} parent=103 // pred_fallthru
          _
        %p660 = scmp.lt.s32.totalorder %s38, 1
        %s661 = scalar_select %p660, %s38, 1
        %s662 = smul.addr %s661, 8
        %s663 = scalar_lea.vmem %s0, %s662
        %p664 = pneg %p59
        %p665 = pneg %p56
        %p666 = pneg %p80
        %p667 = pneg %p77
        %p668 = pneg %p101
        %p669 = pneg %p98
        %p670 = pneg %p122
        %p671 = pneg %p119
        %p672 = scmp.lt.s32.totalorder %s38, 1
        %s673 = scalar_select %p672, %s38, 1
        %s674 = scalar_lea.vmem %s4, %s673
        %p675 = pneg %p148
        %p676 = pneg %p145
        %p677 = pneg %p169
        %p678 = pneg %p166
        %p679 = pneg %p190
        %p680 = pneg %p187
        %p681 = pneg %p211
        %p682 = pneg %p208
        %p683 = pneg %p232
        %p684 = pneg %p229
        %p685 = pneg %p253
        %p686 = pneg %p250
        %p687 = pneg %p274
        %p688 = pneg %p271
        %p689 = pneg %p295
        %p690 = pneg %p292
        %p691 = pneg %p316
        %p692 = pneg %p313
        %p693 = pneg %p337
        %p694 = pneg %p334
        %p695 = pneg %p358
        %p696 = pneg %p355
        %p697 = pneg %p379
        %p698 = pneg %p376
        %p699 = pneg %p400
        %p700 = pneg %p397
        %p701 = pneg %p421
        %p702 = pneg %p418
        %p703 = pneg %p442
        %p704 = pneg %p439
        %p705 = pneg %p463
        %p706 = pneg %p460
        %p707 = pneg %p484
        %p708 = pneg %p481
        %p709 = pneg %p510
        %p710 = pneg %p507
        %s711 = sand.u32 %s497, 1
        %s712 = scalar_lea.sflag [#allocation4], %s711
        %s713 = sand.u32 %s497, 1
        %s714 = smul.addr %s713, 8
        %s715 = scalar_lea.vmem [#allocation10], %s714
        %p716 = scmp.lt.s32.totalorder %s38, 1
        %s717 = scalar_select %p716, %s38, 1
        %s718 = smul.addr %s717, 8
        %s719 = scalar_lea.vmem %s0, %s718
        %p720 = scmp.lt.s32.totalorder %s38, 1
        %s721 = scalar_select %p720, %s38, 1
        %s722 = scalar_lea.vmem %s4, %s721
        %v724 = vld [vmem:[%s719] sm:$0xff]
        %v725 = vld [vmem:[#allocation2] sm:$0xff]
        %v726 = vadd.f32 %v724, %v725
        %v727 = vld [vmem:[%s2] sm:$0x1]
        %v728 = vld [vmem:[%s3] sm:$0x1]
        %vm729 = vcmask 261120
        %v730 = vsel %vm729, %v726, 0.0
        %731 = vadd.xlane.f32.xlu0 %v730
        %v732 = vpop.xlane.xlu0 %731
        %v733 = vrcp.pop 32.0
        %v734 = vmul.f32 %v732, %v733
        %v735 = vsub.f32 %v726, %v734
        %v736 = vmul.f32 %v735, %v735
        %v737 = vsel %vm729, %v736, 0.0
        %738 = vadd.xlane.f32.xlu0 %v737
        %v739 = vpop.xlane.xlu0 %738
        %v740 = vmul.f32 %v739, %v733
        %v741 = vadd.f32 %v740, 1e-12
        %v742 = vrsqrt.pop %v741
        %v743 = vmul.f32 %v735, %v742
        %v745 = vlaneseq
        %v746 = vshrl.u32 %v745, 7
        %v747 = vsub.s32 0, %v746
        %v748 = vrot.slane %v727, %v747
        %v750 = vmul.f32 %v743, %v748
        %v752 = vlaneseq
        %v753 = vshrl.u32 %v752, 7
        %v754 = vsub.s32 0, %v753
        %v755 = vrot.slane %v728, %v754
        %v757 = vadd.f32 %v750, %v755
        %v758 = vpack.c.bf16 %v757, %v757
        %v759 = vld [vmem:[%s5] sm:$0xf]
        %v760 = vld [vmem:[%s5 + $0x4] sm:$0xf]
        %v761 = vld [vmem:[%s5 + $0x8] sm:$0xf]
        %v762 = vld [vmem:[%s5 + $0xc] sm:$0xf]
        %v763 = vld [vmem:[%s6] sm:$0x1]
        %v765 = vlaneseq
        %v766 = vshrl.u32 %v765, 7
        %v767 = vsub.s32 0, %v766
        %v768 = vrot.slane %v763, %v767
        %v774 = vunpack.c.l.b16 %v759
        %v775 = vunpack.c.l.b16 %v760
        %v776 = vunpack.c.l.b16 %v761
        %v777 = vunpack.c.l.b16 %v762
        %v778 = vpack.c.b16 %v775, %v774
        %v779 = vpack.c.b16 %v777, %v776
        %v783 = vsel %vm729, %v758, 0
        %785 = vmatprep.subr.bf16.mxu0 0
        %786 = vmatpush1.bf16.msra.mxu0 0
        %787 = vmatprep.subr.bf16.mxu0 0
        %788 = vmatpush1.bf16.msra.mxu0 0
        %789 = vmatprep.subr.bf16.mxu0 0
        %790 = vmatpush1.bf16.msra.mxu0 0
        %791 = vmatprep.subr.bf16.mxu0 0
        %792 = vmatpush1.bf16.msra.mxu0 0
        %793 = vmatprep.subr.bf16.mxu0 0
        %794 = vmatpush1.bf16.msra.mxu0 0
        %795 = vmatprep.subr.bf16.mxu0 0
        %796 = vmatpush1.bf16.msra.mxu0 0
        %797 = vmatprep.subr.bf16.mxu0 0
        %798 = vmatpush1.bf16.msra.mxu0 %v779
        %799 = vmatprep.subr.bf16.mxu0 0
        %800 = vmatpush1.bf16.msra.mxu0 %v778
        %801 = vmatprep.subr.bf16.mxu0 0
        %802 = vmatpush2.bf16.msra.mxu0 0
        %803 = vmatprep.subr.bf16.mxu0 0
        %804 = vmatpush2.bf16.msra.mxu0 0
        %805 = vmatprep.subr.bf16.mxu0 0
        %806 = vmatpush2.bf16.msra.mxu0 0
        %807 = vmatprep.subr.bf16.mxu0 0
        %808 = vmatpush2.bf16.msra.mxu0 0
        %809 = vmatprep.subr.bf16.mxu0 0
        %810 = vmatpush2.bf16.msra.mxu0 0
        %811 = vmatprep.subr.bf16.mxu0 0
        %812 = vmatpush2.bf16.msra.mxu0 0
        %813 = vmatprep.subr.bf16.mxu0 0
        %814 = vmatpush2.bf16.msra.mxu0 0
        %815 = vmatprep.subr.bf16.mxu0 0
        %816 = vmatpush2.bf16.msra.mxu0 0
        %817 = vmatprep.mubr.bf16.mxu0 0
        %818 = vmatmul.mubr.bf16.gmra.mxu0 %v783
        %v819 = vpop.f32.mrf.mxu0
        %v820 = vadd.f32 %v768, %v819
        %v821 = vpop.f32.mrf.mxu0
        %v822 = vpop.f32.mrf.mxu0
        %v823 = vpop.f32.mrf.mxu0
        %824 = vdwg.mxu0
        %v825 = vld [vmem:[%s7] sm:$0xf]
        %v826 = vld [vmem:[%s7 + $0x4] sm:$0xf]
        %v827 = vld [vmem:[%s7 + $0x8] sm:$0xf]
        %v828 = vld [vmem:[%s7 + $0xc] sm:$0xf]
        %v829 = vld [vmem:[%s8] sm:$0x1]
        %v831 = vlaneseq
        %v832 = vshrl.u32 %v831, 7
        %v833 = vsub.s32 0, %v832
        %v834 = vrot.slane %v829, %v833
        %v840 = vunpack.c.l.b16 %v825
        %v841 = vunpack.c.l.b16 %v826
        %v842 = vunpack.c.l.b16 %v827
        %v843 = vunpack.c.l.b16 %v828
        %v844 = vpack.c.b16 %v841, %v840
        %v845 = vpack.c.b16 %v843, %v842
        %848 = vmatprep.subr.bf16.mxu0 0
        %849 = vmatpush1.bf16.msra.mxu0 0
        %850 = vmatprep.subr.bf16.mxu0 0
        %851 = vmatpush1.bf16.msra.mxu0 0
        %852 = vmatprep.subr.bf16.mxu0 0
        %853 = vmatpush1.bf16.msra.mxu0 0
        %854 = vmatprep.subr.bf16.mxu0 0
        %855 = vmatpush1.bf16.msra.mxu0 0
        %856 = vmatprep.subr.bf16.mxu0 0
        %857 = vmatpush1.bf16.msra.mxu0 0
        %858 = vmatprep.subr.bf16.mxu0 0
        %859 = vmatpush1.bf16.msra.mxu0 0
        %860 = vmatprep.subr.bf16.mxu0 0
        %861 = vmatpush1.bf16.msra.mxu0 %v845
        %862 = vmatprep.subr.bf16.mxu0 0
        %863 = vmatpush1.bf16.msra.mxu0 %v844
        %864 = vmatprep.subr.bf16.mxu0 0
        %865 = vmatpush2.bf16.msra.mxu0 0
        %866 = vmatprep.subr.bf16.mxu0 0
        %867 = vmatpush2.bf16.msra.mxu0 0
        %868 = vmatprep.subr.bf16.mxu0 0
        %869 = vmatpush2.bf16.msra.mxu0 0
        %870 = vmatprep.subr.bf16.mxu0 0
        %871 = vmatpush2.bf16.msra.mxu0 0
        %872 = vmatprep.subr.bf16.mxu0 0
        %873 = vmatpush2.bf16.msra.mxu0 0
        %874 = vmatprep.subr.bf16.mxu0 0
        %875 = vmatpush2.bf16.msra.mxu0 0
        %876 = vmatprep.subr.bf16.mxu0 0
        %877 = vmatpush2.bf16.msra.mxu0 0
        %878 = vmatprep.subr.bf16.mxu0 0
        %879 = vmatpush2.bf16.msra.mxu0 0
        %880 = vmatprep.mubr.bf16.mxu0 0
        %881 = vmatmul.mubr.bf16.gmra.mxu0 %v783
        %v882 = vpop.f32.mrf.mxu0
        %v883 = vadd.f32 %v834, %v882
        %v884 = vpop.f32.mrf.mxu0
        %v885 = vpop.f32.mrf.mxu0
        %v886 = vpop.f32.mrf.mxu0
        %887 = vdwg.mxu0
        %v888 = vld [vmem:[#allocation5] sm:$0xf]
        %v889 = vld [vmem:[#allocation5 + $0x4] sm:$0xf]
        %v890 = vld [vmem:[#allocation5 + $0x8] sm:$0xf]
        %v891 = vld [vmem:[#allocation5 + $0xc] sm:$0xf]
        %v892 = vld [vmem:[%s10] sm:$0x1]
        %v894 = vlaneseq
        %v895 = vshrl.u32 %v894, 7
        %v896 = vsub.s32 0, %v895
        %v897 = vrot.slane %v892, %v896
        %v903 = vunpack.c.l.b16 %v888
        %v904 = vunpack.c.l.b16 %v889
        %v905 = vunpack.c.l.b16 %v890
        %v906 = vunpack.c.l.b16 %v891
        %v907 = vpack.c.b16 %v904, %v903
        %v908 = vpack.c.b16 %v906, %v905
        %911 = vmatprep.subr.bf16.mxu0 0
        %912 = vmatpush1.bf16.msra.mxu0 0
        %913 = vmatprep.subr.bf16.mxu0 0
        %914 = vmatpush1.bf16.msra.mxu0 0
        %915 = vmatprep.subr.bf16.mxu0 0
        %916 = vmatpush1.bf16.msra.mxu0 0
        %917 = vmatprep.subr.bf16.mxu0 0
        %918 = vmatpush1.bf16.msra.mxu0 0
        %919 = vmatprep.subr.bf16.mxu0 0
        %920 = vmatpush1.bf16.msra.mxu0 0
        %921 = vmatprep.subr.bf16.mxu0 0
        %922 = vmatpush1.bf16.msra.mxu0 0
        %923 = vmatprep.subr.bf16.mxu0 0
        %924 = vmatpush1.bf16.msra.mxu0 %v908
        %925 = vmatprep.subr.bf16.mxu0 0
        %926 = vmatpush1.bf16.msra.mxu0 %v907
        %927 = vmatprep.subr.bf16.mxu0 0
        %928 = vmatpush2.bf16.msra.mxu0 0
        %929 = vmatprep.subr.bf16.mxu0 0
        %930 = vmatpush2.bf16.msra.mxu0 0
        %931 = vmatprep.subr.bf16.mxu0 0
        %932 = vmatpush2.bf16.msra.mxu0 0
        %933 = vmatprep.subr.bf16.mxu0 0
        %934 = vmatpush2.bf16.msra.mxu0 0
        %935 = vmatprep.subr.bf16.mxu0 0
        %936 = vmatpush2.bf16.msra.mxu0 0
        %937 = vmatprep.subr.bf16.mxu0 0
        %938 = vmatpush2.bf16.msra.mxu0 0
        %939 = vmatprep.subr.bf16.mxu0 0
        %940 = vmatpush2.bf16.msra.mxu0 0
        %941 = vmatprep.subr.bf16.mxu0 0
        %942 = vmatpush2.bf16.msra.mxu0 0
        %943 = vmatprep.mubr.bf16.mxu0 0
        %944 = vmatmul.mubr.bf16.gmra.mxu0 %v783
        %v945 = vpop.f32.mrf.mxu0
        %v946 = vadd.f32 %v897, %v945
        %v947 = vpop.f32.mrf.mxu0
        %v948 = vpop.f32.mrf.mxu0
        %v949 = vpop.f32.mrf.mxu0
        %950 = vdwg.mxu0
        %v951 = vmul.f32 %v820, 0.35355338
        %v952 = vpack.c.bf16 %v951, %v951
        %v953 = vpack.c.bf16 %v883, %v883
        %v954 = vpack.c.bf16 %v946, %v946
        %956 = vrot.lane.b32.xlu0 %v952, 120
        %v957 = vpop.permute.xlu0 %956
        %958 = vrot.lane.b32.xlu0 %v952, 112
        %v959 = vpop.permute.xlu0 %958
        %960 = vrot.lane.b32.xlu0 %v952, 104
        %v961 = vpop.permute.xlu0 %960
        %963 = vrot.lane.b32.xlu0 %v953, 120
        %v964 = vpop.permute.xlu0 %963
        %965 = vrot.lane.b32.xlu0 %v953, 112
        %v966 = vpop.permute.xlu0 %965
        %967 = vrot.lane.b32.xlu0 %v953, 104
        %v968 = vpop.permute.xlu0 %967
        %970 = vrot.lane.b32.xlu0 %v954, 120
        %v971 = vpop.permute.xlu0 %970
        %972 = vrot.lane.b32.xlu0 %v954, 112
        %v973 = vpop.permute.xlu0 %972
        %974 = vrot.lane.b32.xlu0 %v954, 104
        %v975 = vpop.permute.xlu0 %974
        %vm976 = vcmask 64512
        %v978 = vsel %vm976, %v952, 0
        %v981 = vsel %vm976, %v953, 0
        %983 = vmatprep.subr.bf16.mxu0 0
        %984 = vmatpush1.bf16.xpose.msra.mxu0 0
        %985 = vmatprep.subr.bf16.mxu0 0
        %986 = vmatpush1.bf16.xpose.msra.mxu0 0
        %987 = vmatprep.subr.bf16.mxu0 0
        %988 = vmatpush1.bf16.xpose.msra.mxu0 0
        %989 = vmatprep.subr.bf16.mxu0 0
        %990 = vmatpush1.bf16.xpose.msra.mxu0 0
        %991 = vmatprep.subr.bf16.mxu0 0
        %992 = vmatpush1.bf16.xpose.msra.mxu0 0
        %993 = vmatprep.subr.bf16.mxu0 0
        %994 = vmatpush1.bf16.xpose.msra.mxu0 0
        %995 = vmatprep.subr.bf16.mxu0 0
        %996 = vmatpush1.bf16.xpose.msra.mxu0 0
        %997 = vmatprep.subr.bf16.mxu0 0
        %998 = vmatpush1.bf16.xpose.msra.mxu0 %v981
        %999 = vmatprep.subr.bf16.mxu0 0
        %1000 = vmatpush2.bf16.xpose.msra.mxu0 0
        %1001 = vmatprep.subr.bf16.mxu0 0
        %1002 = vmatpush2.bf16.xpose.msra.mxu0 0
        %1003 = vmatprep.subr.bf16.mxu0 0
        %1004 = vmatpush2.bf16.xpose.msra.mxu0 0
        %1005 = vmatprep.subr.bf16.mxu0 0
        %1006 = vmatpush2.bf16.xpose.msra.mxu0 0
        %1007 = vmatprep.subr.bf16.mxu0 0
        %1008 = vmatpush2.bf16.xpose.msra.mxu0 0
        %1009 = vmatprep.subr.bf16.mxu0 0
        %1010 = vmatpush2.bf16.xpose.msra.mxu0 0
        %1011 = vmatprep.subr.bf16.mxu0 0
        %1012 = vmatpush2.bf16.xpose.msra.mxu0 0
        %1013 = vmatprep.subr.bf16.mxu0 0
        %1014 = vmatpush2.bf16.xpose.msra.mxu0 0
        %1015 = vmatprep.mubr.bf16.mxu0 0
        %1016 = vmatmul.mubr.bf16.gmra.mxu0 %v978
        %v1017 = vpop.f32.mrf.mxu0
        %v1018 = vadd.f32 0.0, %v1017
        %v1019 = vpop.f32.mrf.mxu0
        %v1020 = vpop.f32.mrf.mxu0
        %v1021 = vpop.f32.mrf.mxu0
        %1022 = vdwg.mxu0
        %v1024 = vsel %vm976, %v957, 0
        %v1027 = vsel %vm976, %v964, 0
        %1029 = vmatprep.subr.bf16.mxu0 0
        %1030 = vmatpush1.bf16.xpose.msra.mxu0 0
        %1031 = vmatprep.subr.bf16.mxu0 0
        %1032 = vmatpush1.bf16.xpose.msra.mxu0 0
        %1033 = vmatprep.subr.bf16.mxu0 0
        %1034 = vmatpush1.bf16.xpose.msra.mxu0 0
        %1035 = vmatprep.subr.bf16.mxu0 0
        %1036 = vmatpush1.bf16.xpose.msra.mxu0 0
        %1037 = vmatprep.subr.bf16.mxu0 0
        %1038 = vmatpush1.bf16.xpose.msra.mxu0 0
        %1039 = vmatprep.subr.bf16.mxu0 0
        %1040 = vmatpush1.bf16.xpose.msra.mxu0 0
        %1041 = vmatprep.subr.bf16.mxu0 0
        %1042 = vmatpush1.bf16.xpose.msra.mxu0 0
        %1043 = vmatprep.subr.bf16.mxu0 0
        %1044 = vmatpush1.bf16.xpose.msra.mxu0 %v1027
        %1045 = vmatprep.subr.bf16.mxu0 0
        %1046 = vmatpush2.bf16.xpose.msra.mxu0 0
        %1047 = vmatprep.subr.bf16.mxu0 0
        %1048 = vmatpush2.bf16.xpose.msra.mxu0 0
        %1049 = vmatprep.subr.bf16.mxu0 0
        %1050 = vmatpush2.bf16.xpose.msra.mxu0 0
        %1051 = vmatprep.subr.bf16.mxu0 0
        %1052 = vmatpush2.bf16.xpose.msra.mxu0 0
        %1053 = vmatprep.subr.bf16.mxu0 0
        %1054 = vmatpush2.bf16.xpose.msra.mxu0 0
        %1055 = vmatprep.subr.bf16.mxu0 0
        %1056 = vmatpush2.bf16.xpose.msra.mxu0 0
        %1057 = vmatprep.subr.bf16.mxu0 0
        %1058 = vmatpush2.bf16.xpose.msra.mxu0 0
        %1059 = vmatprep.subr.bf16.mxu0 0
        %1060 = vmatpush2.bf16.xpose.msra.mxu0 0
        %1061 = vmatprep.mubr.bf16.mxu0 0
        %1062 = vmatmul.mubr.bf16.gmra.mxu0 %v1024
        %v1063 = vpop.f32.mrf.mxu0
        %v1064 = vadd.f32 0.0, %v1063
        %v1065 = vpop.f32.mrf.mxu0
        %v1066 = vpop.f32.mrf.mxu0
        %v1067 = vpop.f32.mrf.mxu0
        %1068 = vdwg.mxu0
        %v1070 = vsel %vm976, %v959, 0
        %v1073 = vsel %vm976, %v966, 0
        %1075 = vmatprep.subr.bf16.mxu0 0
        %1076 = vmatpush1.bf16.xpose.msra.mxu0 0
        %1077 = vmatprep.subr.bf16.mxu0 0
        %1078 = vmatpush1.bf16.xpose.msra.mxu0 0
        %1079 = vmatprep.subr.bf16.mxu0 0
        %1080 = vmatpush1.bf16.xpose.msra.mxu0 0
        %1081 = vmatprep.subr.bf16.mxu0 0
        %1082 = vmatpush1.bf16.xpose.msra.mxu0 0
        %1083 = vmatprep.subr.bf16.mxu0 0
        %1084 = vmatpush1.bf16.xpose.msra.mxu0 0
        %1085 = vmatprep.subr.bf16.mxu0 0
        %1086 = vmatpush1.bf16.xpose.msra.mxu0 0
        %1087 = vmatprep.subr.bf16.mxu0 0
        %1088 = vmatpush1.bf16.xpose.msra.mxu0 0
        %1089 = vmatprep.subr.bf16.mxu0 0
        %1090 = vmatpush1.bf16.xpose.msra.mxu0 %v1073
        %1091 = vmatprep.subr.bf16.mxu0 0
        %1092 = vmatpush2.bf16.xpose.msra.mxu0 0
        %1093 = vmatprep.subr.bf16.mxu0 0
        %1094 = vmatpush2.bf16.xpose.msra.mxu0 0
        %1095 = vmatprep.subr.bf16.mxu0 0
        %1096 = vmatpush2.bf16.xpose.msra.mxu0 0
        %1097 = vmatprep.subr.bf16.mxu0 0
        %1098 = vmatpush2.bf16.xpose.msra.mxu0 0
        %1099 = vmatprep.subr.bf16.mxu0 0
        %1100 = vmatpush2.bf16.xpose.msra.mxu0 0
        %1101 = vmatprep.subr.bf16.mxu0 0
        %1102 = vmatpush2.bf16.xpose.msra.mxu0 0
        %1103 = vmatprep.subr.bf16.mxu0 0
        %1104 = vmatpush2.bf16.xpose.msra.mxu0 0
        %1105 = vmatprep.subr.bf16.mxu0 0
        %1106 = vmatpush2.bf16.xpose.msra.mxu0 0
        %1107 = vmatprep.mubr.bf16.mxu0 0
        %1108 = vmatmul.mubr.bf16.gmra.mxu0 %v1070
        %v1109 = vpop.f32.mrf.mxu0
        %v1110 = vadd.f32 0.0, %v1109
        %v1111 = vpop.f32.mrf.mxu0
        %v1112 = vpop.f32.mrf.mxu0
        %v1113 = vpop.f32.mrf.mxu0
        %1114 = vdwg.mxu0
        %v1116 = vsel %vm976, %v961, 0
        %v1119 = vsel %vm976, %v968, 0
        %1121 = vmatprep.subr.bf16.mxu0 0
        %1122 = vmatpush1.bf16.xpose.msra.mxu0 0
        %1123 = vmatprep.subr.bf16.mxu0 0
        %1124 = vmatpush1.bf16.xpose.msra.mxu0 0
        %1125 = vmatprep.subr.bf16.mxu0 0
        %1126 = vmatpush1.bf16.xpose.msra.mxu0 0
        %1127 = vmatprep.subr.bf16.mxu0 0
        %1128 = vmatpush1.bf16.xpose.msra.mxu0 0
        %1129 = vmatprep.subr.bf16.mxu0 0
        %1130 = vmatpush1.bf16.xpose.msra.mxu0 0
        %1131 = vmatprep.subr.bf16.mxu0 0
        %1132 = vmatpush1.bf16.xpose.msra.mxu0 0
        %1133 = vmatprep.subr.bf16.mxu0 0
        %1134 = vmatpush1.bf16.xpose.msra.mxu0 0
        %1135 = vmatprep.subr.bf16.mxu0 0
        %1136 = vmatpush1.bf16.xpose.msra.mxu0 %v1119
        %1137 = vmatprep.subr.bf16.mxu0 0
        %1138 = vmatpush2.bf16.xpose.msra.mxu0 0
        %1139 = vmatprep.subr.bf16.mxu0 0
        %1140 = vmatpush2.bf16.xpose.msra.mxu0 0
        %1141 = vmatprep.subr.bf16.mxu0 0
        %1142 = vmatpush2.bf16.xpose.msra.mxu0 0
        %1143 = vmatprep.subr.bf16.mxu0 0
        %1144 = vmatpush2.bf16.xpose.msra.mxu0 0
        %1145 = vmatprep.subr.bf16.mxu0 0
        %1146 = vmatpush2.bf16.xpose.msra.mxu0 0
        %1147 = vmatprep.subr.bf16.mxu0 0
        %1148 = vmatpush2.bf16.xpose.msra.mxu0 0
        %1149 = vmatprep.subr.bf16.mxu0 0
        %1150 = vmatpush2.bf16.xpose.msra.mxu0 0
        %1151 = vmatprep.subr.bf16.mxu0 0
        %1152 = vmatpush2.bf16.xpose.msra.mxu0 0
        %1153 = vmatprep.mubr.bf16.mxu0 0
        %1154 = vmatmul.mubr.bf16.gmra.mxu0 %v1116
        %v1155 = vpop.f32.mrf.mxu0
        %v1156 = vadd.f32 0.0, %v1155
        %v1157 = vpop.f32.mrf.mxu0
        %v1158 = vpop.f32.mrf.mxu0
        %v1159 = vpop.f32.mrf.mxu0
        %1160 = vdwg.mxu0
        %v1161 = vld [vmem:[%s722] sm:$0x1]
        %vm1162 = vcmp.eq.f32.partialorder %v1161, 0.0
        %v1163 = vsel %vm1162, 1, 0
        %v1164 = vlaneseq
        %v1165 = vshrl.u32 %v1164, 7
        %v1166 = vsub.s32 0, %v1165
        %v1167 = vrot.slane %v1163, %v1166
        %vm1168 = vcmp.eq.s32.totalorder %v1167, 1
        %v1169 = vsel %vm1168, -3.4028235e+38, %v1018
        %v1170 = vsel %vm1168, -3.4028235e+38, %v1064
        %v1171 = vsel %vm1168, -3.4028235e+38, %v1110
        %v1172 = vsel %vm1168, -3.4028235e+38, %v1156
        %v1173 = vsel %vm976, %v1169, -inf
        %1174 = vmax.xlane.f32.xlu0 %v1173
        %v1175 = vpop.xlane.xlu0 %1174
        %v1176 = vsel %vm976, %v1170, -inf
        %1177 = vmax.xlane.f32.xlu0 %v1176
        %v1178 = vpop.xlane.xlu0 %1177
        %v1179 = vsel %vm976, %v1171, -inf
        %1180 = vmax.xlane.f32.xlu0 %v1179
        %v1181 = vpop.xlane.xlu0 %1180
        %v1182 = vsel %vm976, %v1172, -inf
        %1183 = vmax.xlane.f32.xlu0 %v1182
        %v1184 = vpop.xlane.xlu0 %1183
        %v1185 = vsub.f32 %v1169, %v1175
        %v1186 = vsub.f32 %v1170, %v1178
        %v1187 = vsub.f32 %v1171, %v1181
        %v1188 = vsub.f32 %v1172, %v1184
        %v1189 = vmul.f32 %v1185, 1.442695
        %v1190 = vpow.pop %v1189
        %v1191 = vmul.f32 %v1186, 1.442695
        %v1192 = vpow.pop %v1191
        %v1193 = vmul.f32 %v1187, 1.442695
        %v1194 = vpow.pop %v1193
        %v1195 = vmul.f32 %v1188, 1.442695
        %v1196 = vpow.pop %v1195
        %v1197 = vsel %vm976, %v1190, 0.0
        %1198 = vadd.xlane.f32.xlu0 %v1197
        %v1199 = vpop.xlane.xlu0 %1198
        %v1200 = vsel %vm976, %v1192, 0.0
        %1201 = vadd.xlane.f32.xlu0 %v1200
        %v1202 = vpop.xlane.xlu0 %1201
        %v1203 = vsel %vm976, %v1194, 0.0
        %1204 = vadd.xlane.f32.xlu0 %v1203
        %v1205 = vpop.xlane.xlu0 %1204
        %v1206 = vsel %vm976, %v1196, 0.0
        %1207 = vadd.xlane.f32.xlu0 %v1206
        %v1208 = vpop.xlane.xlu0 %1207
        %v1209 = vrcp.pop %v1199
        %v1210 = vrcp.pop %v1202
        %v1211 = vrcp.pop %v1205
        %v1212 = vrcp.pop %v1208
        %v1213 = vmul.f32 %v1190, %v1209
        %v1214 = vmul.f32 %v1192, %v1210
        %v1215 = vmul.f32 %v1194, %v1211
        %v1216 = vmul.f32 %v1196, %v1212
        %v1217 = vpack.c.bf16 %v1213, %v1213
        %v1218 = vpack.c.bf16 %v1214, %v1214
        %v1219 = vpack.c.bf16 %v1215, %v1215
        %v1220 = vpack.c.bf16 %v1216, %v1216
        %v1222 = vsel %vm976, %v1217, 0
        %vm1224 = vcmask 1043456
        %v1226 = vsel %vm1224, %v954, 0
        %1228 = vmatprep.subr.bf16.mxu0 0
        %1229 = vmatpush1.bf16.msra.mxu0 0
        %1230 = vmatprep.subr.bf16.mxu0 0
        %1231 = vmatpush1.bf16.msra.mxu0 0
        %1232 = vmatprep.subr.bf16.mxu0 0
        %1233 = vmatpush1.bf16.msra.mxu0 0
        %1234 = vmatprep.subr.bf16.mxu0 0
        %1235 = vmatpush1.bf16.msra.mxu0 0
        %1236 = vmatprep.subr.bf16.mxu0 0
        %1237 = vmatpush1.bf16.msra.mxu0 0
        %1238 = vmatprep.subr.bf16.mxu0 0
        %1239 = vmatpush1.bf16.msra.mxu0 0
        %1240 = vmatprep.subr.bf16.mxu0 0
        %1241 = vmatpush1.bf16.msra.mxu0 0
        %1242 = vmatprep.subr.bf16.mxu0 0
        %1243 = vmatpush1.bf16.msra.mxu0 %v1226
        %1244 = vmatprep.subr.bf16.mxu0 0
        %1245 = vmatpush2.bf16.msra.mxu0 0
        %1246 = vmatprep.subr.bf16.mxu0 0
        %1247 = vmatpush2.bf16.msra.mxu0 0
        %1248 = vmatprep.subr.bf16.mxu0 0
        %1249 = vmatpush2.bf16.msra.mxu0 0
        %1250 = vmatprep.subr.bf16.mxu0 0
        %1251 = vmatpush2.bf16.msra.mxu0 0
        %1252 = vmatprep.subr.bf16.mxu0 0
        %1253 = vmatpush2.bf16.msra.mxu0 0
        %1254 = vmatprep.subr.bf16.mxu0 0
        %1255 = vmatpush2.bf16.msra.mxu0 0
        %1256 = vmatprep.subr.bf16.mxu0 0
        %1257 = vmatpush2.bf16.msra.mxu0 0
        %1258 = vmatprep.subr.bf16.mxu0 0
        %1259 = vmatpush2.bf16.msra.mxu0 0
        %1260 = vmatprep.mubr.bf16.mxu0 0
        %1261 = vmatmul.mubr.bf16.gmra.mxu0 %v1222
        %v1262 = vpop.f32.mrf.mxu0
        %v1263 = vadd.f32 0.0, %v1262
        %v1264 = vpop.f32.mrf.mxu0
        %v1265 = vpop.f32.mrf.mxu0
        %v1266 = vpop.f32.mrf.mxu0
        %1267 = vdwg.mxu0
        %v1269 = vsel %vm976, %v1218, 0
        %v1272 = vsel %vm1224, %v971, 0
        %1274 = vmatprep.subr.bf16.mxu0 0
        %1275 = vmatpush1.bf16.msra.mxu0 0
        %1276 = vmatprep.subr.bf16.mxu0 0
        %1277 = vmatpush1.bf16.msra.mxu0 0
        %1278 = vmatprep.subr.bf16.mxu0 0
        %1279 = vmatpush1.bf16.msra.mxu0 0
        %1280 = vmatprep.subr.bf16.mxu0 0
        %1281 = vmatpush1.bf16.msra.mxu0 0
        %1282 = vmatprep.subr.bf16.mxu0 0
        %1283 = vmatpush1.bf16.msra.mxu0 0
        %1284 = vmatprep.subr.bf16.mxu0 0
        %1285 = vmatpush1.bf16.msra.mxu0 0
        %1286 = vmatprep.subr.bf16.mxu0 0
        %1287 = vmatpush1.bf16.msra.mxu0 0
        %1288 = vmatprep.subr.bf16.mxu0 0
        %1289 = vmatpush1.bf16.msra.mxu0 %v1272
        %1290 = vmatprep.subr.bf16.mxu0 0
        %1291 = vmatpush2.bf16.msra.mxu0 0
        %1292 = vmatprep.subr.bf16.mxu0 0
        %1293 = vmatpush2.bf16.msra.mxu0 0
        %1294 = vmatprep.subr.bf16.mxu0 0
        %1295 = vmatpush2.bf16.msra.mxu0 0
        %1296 = vmatprep.subr.bf16.mxu0 0
        %1297 = vmatpush2.bf16.msra.mxu0 0
        %1298 = vmatprep.subr.bf16.mxu0 0
        %1299 = vmatpush2.bf16.msra.mxu0 0
        %1300 = vmatprep.subr.bf16.mxu0 0
        %1301 = vmatpush2.bf16.msra.mxu0 0
        %1302 = vmatprep.subr.bf16.mxu0 0
        %1303 = vmatpush2.bf16.msra.mxu0 0
        %1304 = vmatprep.subr.bf16.mxu0 0
        %1305 = vmatpush2.bf16.msra.mxu0 0
        %1306 = vmatprep.mubr.bf16.mxu0 0
        %1307 = vmatmul.mubr.bf16.gmra.mxu0 %v1269
        %v1308 = vpop.f32.mrf.mxu0
        %v1309 = vadd.f32 0.0, %v1308
        %v1310 = vpop.f32.mrf.mxu0
        %v1311 = vpop.f32.mrf.mxu0
        %v1312 = vpop.f32.mrf.mxu0
        %1313 = vdwg.mxu0
        %v1315 = vsel %vm976, %v1219, 0
        %v1318 = vsel %vm1224, %v973, 0
        %1320 = vmatprep.subr.bf16.mxu0 0
        %1321 = vmatpush1.bf16.msra.mxu0 0
        %1322 = vmatprep.subr.bf16.mxu0 0
        %1323 = vmatpush1.bf16.msra.mxu0 0
        %1324 = vmatprep.subr.bf16.mxu0 0
        %1325 = vmatpush1.bf16.msra.mxu0 0
        %1326 = vmatprep.subr.bf16.mxu0 0
        %1327 = vmatpush1.bf16.msra.mxu0 0
        %1328 = vmatprep.subr.bf16.mxu0 0
        %1329 = vmatpush1.bf16.msra.mxu0 0
        %1330 = vmatprep.subr.bf16.mxu0 0
        %1331 = vmatpush1.bf16.msra.mxu0 0
        %1332 = vmatprep.subr.bf16.mxu0 0
        %1333 = vmatpush1.bf16.msra.mxu0 0
        %1334 = vmatprep.subr.bf16.mxu0 0
        %1335 = vmatpush1.bf16.msra.mxu0 %v1318
        %1336 = vmatprep.subr.bf16.mxu0 0
        %1337 = vmatpush2.bf16.msra.mxu0 0
        %1338 = vmatprep.subr.bf16.mxu0 0
        %1339 = vmatpush2.bf16.msra.mxu0 0
        %1340 = vmatprep.subr.bf16.mxu0 0
        %1341 = vmatpush2.bf16.msra.mxu0 0
        %1342 = vmatprep.subr.bf16.mxu0 0
        %1343 = vmatpush2.bf16.msra.mxu0 0
        %1344 = vmatprep.subr.bf16.mxu0 0
        %1345 = vmatpush2.bf16.msra.mxu0 0
        %1346 = vmatprep.subr.bf16.mxu0 0
        %1347 = vmatpush2.bf16.msra.mxu0 0
        %1348 = vmatprep.subr.bf16.mxu0 0
        %1349 = vmatpush2.bf16.msra.mxu0 0
        %1350 = vmatprep.subr.bf16.mxu0 0
        %1351 = vmatpush2.bf16.msra.mxu0 0
        %1352 = vmatprep.mubr.bf16.mxu0 0
        %1353 = vmatmul.mubr.bf16.gmra.mxu0 %v1315
        %v1354 = vpop.f32.mrf.mxu0
        %v1355 = vadd.f32 0.0, %v1354
        %v1356 = vpop.f32.mrf.mxu0
        %v1357 = vpop.f32.mrf.mxu0
        %v1358 = vpop.f32.mrf.mxu0
        %1359 = vdwg.mxu0
        %v1361 = vsel %vm976, %v1220, 0
        %v1364 = vsel %vm1224, %v975, 0
        %1366 = vmatprep.subr.bf16.mxu0 0
        %1367 = vmatpush1.bf16.msra.mxu0 0
        %1368 = vmatprep.subr.bf16.mxu0 0
        %1369 = vmatpush1.bf16.msra.mxu0 0
        %1370 = vmatprep.subr.bf16.mxu0 0
        %1371 = vmatpush1.bf16.msra.mxu0 0
        %1372 = vmatprep.subr.bf16.mxu0 0
        %1373 = vmatpush1.bf16.msra.mxu0 0
        %1374 = vmatprep.subr.bf16.mxu0 0
        %1375 = vmatpush1.bf16.msra.mxu0 0
        %1376 = vmatprep.subr.bf16.mxu0 0
        %1377 = vmatpush1.bf16.msra.mxu0 0
        %1378 = vmatprep.subr.bf16.mxu0 0
        %1379 = vmatpush1.bf16.msra.mxu0 0
        %1380 = vmatprep.subr.bf16.mxu0 0
        %1381 = vmatpush1.bf16.msra.mxu0 %v1364
        %1382 = vmatprep.subr.bf16.mxu0 0
        %1383 = vmatpush2.bf16.msra.mxu0 0
        %1384 = vmatprep.subr.bf16.mxu0 0
        %1385 = vmatpush2.bf16.msra.mxu0 0
        %1386 = vmatprep.subr.bf16.mxu0 0
        %1387 = vmatpush2.bf16.msra.mxu0 0
        %1388 = vmatprep.subr.bf16.mxu0 0
        %1389 = vmatpush2.bf16.msra.mxu0 0
        %1390 = vmatprep.subr.bf16.mxu0 0
        %1391 = vmatpush2.bf16.msra.mxu0 0
        %1392 = vmatprep.subr.bf16.mxu0 0
        %1393 = vmatpush2.bf16.msra.mxu0 0
        %1394 = vmatprep.subr.bf16.mxu0 0
        %1395 = vmatpush2.bf16.msra.mxu0 0
        %1396 = vmatprep.subr.bf16.mxu0 0
        %1397 = vmatpush2.bf16.msra.mxu0 0
        %1398 = vmatprep.mubr.bf16.mxu0 0
        %1399 = vmatmul.mubr.bf16.gmra.mxu0 %v1361
        %v1400 = vpop.f32.mrf.mxu0
        %v1401 = vadd.f32 0.0, %v1400
        %v1402 = vpop.f32.mrf.mxu0
        %v1403 = vpop.f32.mrf.mxu0
        %v1404 = vpop.f32.mrf.mxu0
        %1405 = vdwg.mxu0
        %1407 = vrot.lane.b32.xlu0 %v1309, 8
        %v1408 = vpop.permute.xlu0 %1407
        %1411 = vrot.lane.b32.xlu0 %v1355, 16
        %v1412 = vpop.permute.xlu0 %1411
        %1415 = vrot.lane.b32.xlu0 %v1401, 24
        %v1416 = vpop.permute.xlu0 %1415
        %v1418 = vsel %vm976, %v1263, %v1408
        %vm1419 = vcmask 130048
        %v1420 = vsel %vm1419, %v1418, %v1412
        %vm1421 = vcmask 195584
        %v1422 = vsel %vm1421, %v1420, %v1416
        %v1423 = vpack.c.bf16 %v1422, %v1422
        %v1424 = vld [vmem:[#allocation7] sm:$0xf]
        %v1425 = vld [vmem:[#allocation7 + $0x4] sm:$0xf]
        %v1426 = vld [vmem:[#allocation7 + $0x8] sm:$0xf]
        %v1427 = vld [vmem:[#allocation7 + $0xc] sm:$0xf]
        %v1428 = vld [vmem:[%s12] sm:$0x1]
        %v1430 = vlaneseq
        %v1431 = vshrl.u32 %v1430, 7
        %v1432 = vsub.s32 0, %v1431
        %v1433 = vrot.slane %v1428, %v1432
        %v1439 = vunpack.c.l.b16 %v1424
        %v1440 = vunpack.c.l.b16 %v1425
        %v1441 = vunpack.c.l.b16 %v1426
        %v1442 = vunpack.c.l.b16 %v1427
        %v1443 = vpack.c.b16 %v1440, %v1439
        %v1444 = vpack.c.b16 %v1442, %v1441
        %v1448 = vsel %vm729, %v1423, 0
        %1450 = vmatprep.subr.bf16.mxu0 0
        %1451 = vmatpush1.bf16.msra.mxu0 0
        %1452 = vmatprep.subr.bf16.mxu0 0
        %1453 = vmatpush1.bf16.msra.mxu0 0
        %1454 = vmatprep.subr.bf16.mxu0 0
        %1455 = vmatpush1.bf16.msra.mxu0 0
        %1456 = vmatprep.subr.bf16.mxu0 0
        %1457 = vmatpush1.bf16.msra.mxu0 0
        %1458 = vmatprep.subr.bf16.mxu0 0
        %1459 = vmatpush1.bf16.msra.mxu0 0
        %1460 = vmatprep.subr.bf16.mxu0 0
        %1461 = vmatpush1.bf16.msra.mxu0 0
        %1462 = vmatprep.subr.bf16.mxu0 0
        %1463 = vmatpush1.bf16.msra.mxu0 %v1444
        %1464 = vmatprep.subr.bf16.mxu0 0
        %1465 = vmatpush1.bf16.msra.mxu0 %v1443
        %1466 = vmatprep.subr.bf16.mxu0 0
        %1467 = vmatpush2.bf16.msra.mxu0 0
        %1468 = vmatprep.subr.bf16.mxu0 0
        %1469 = vmatpush2.bf16.msra.mxu0 0
        %1470 = vmatprep.subr.bf16.mxu0 0
        %1471 = vmatpush2.bf16.msra.mxu0 0
        %1472 = vmatprep.subr.bf16.mxu0 0
        %1473 = vmatpush2.bf16.msra.mxu0 0
        %1474 = vmatprep.subr.bf16.mxu0 0
        %1475 = vmatpush2.bf16.msra.mxu0 0
        %1476 = vmatprep.subr.bf16.mxu0 0
        %1477 = vmatpush2.bf16.msra.mxu0 0
        %1478 = vmatprep.subr.bf16.mxu0 0
        %1479 = vmatpush2.bf16.msra.mxu0 0
        %1480 = vmatprep.subr.bf16.mxu0 0
        %1481 = vmatpush2.bf16.msra.mxu0 0
        %1482 = vmatprep.mubr.bf16.mxu0 0
        %1483 = vmatmul.mubr.bf16.gmra.mxu0 %v1448
        %v1484 = vpop.f32.mrf.mxu0
        %v1485 = vadd.f32 %v1433, %v1484
        %v1486 = vpop.f32.mrf.mxu0
        %v1487 = vpop.f32.mrf.mxu0
        %v1488 = vpop.f32.mrf.mxu0
        %1489 = vdwg.mxu0
        %v1490 = vadd.f32 %v1485, %v757
        %v1491 = vld [vmem:[%s13] sm:$0x1]
        %v1492 = vld [vmem:[%s14] sm:$0x1]
        %v1493 = vsel %vm729, %v1490, 0.0
        %1494 = vadd.xlane.f32.xlu0 %v1493
        %v1495 = vpop.xlane.xlu0 %1494
        %v1496 = vmul.f32 %v1495, %v733
        %v1497 = vsub.f32 %v1490, %v1496
        %v1498 = vmul.f32 %v1497, %v1497
        %v1499 = vsel %vm729, %v1498, 0.0
        %1500 = vadd.xlane.f32.xlu0 %v1499
        %v1501 = vpop.xlane.xlu0 %1500
        %v1502 = vmul.f32 %v1501, %v733
        %v1503 = vadd.f32 %v1502, 1e-12
        %v1504 = vrsqrt.pop %v1503
        %v1505 = vmul.f32 %v1497, %v1504
        %v1507 = vlaneseq
        %v1508 = vshrl.u32 %v1507, 7
        %v1509 = vsub.s32 0, %v1508
        %v1510 = vrot.slane %v1491, %v1509
        %v1512 = vmul.f32 %v1505, %v1510
        %v1514 = vlaneseq
        %v1515 = vshrl.u32 %v1514, 7
        %v1516 = vsub.s32 0, %v1515
        %v1517 = vrot.slane %v1492, %v1516
        %v1519 = vadd.f32 %v1512, %v1517
        %v1520 = vpack.c.bf16 %v1519, %v1519
        %v1521 = vld [vmem:[#allocation8] sm:$0xf]
        %v1522 = vld [vmem:[#allocation8 + $0x4] sm:$0xf]
        %v1523 = vld [vmem:[#allocation8 + $0x8] sm:$0xf]
        %v1524 = vld [vmem:[#allocation8 + $0xc] sm:$0xf]
        %v1525 = vld [vmem:[%s16] sm:$0x1]
        %v1527 = vlaneseq
        %v1528 = vshrl.u32 %v1527, 7
        %v1529 = vsub.s32 0, %v1528
        %v1530 = vrot.slane %v1525, %v1529
        %v1536 = vunpack.c.l.b16 %v1521
        %v1537 = vunpack.c.l.b16 %v1522
        %v1538 = vunpack.c.l.b16 %v1523
        %v1539 = vunpack.c.l.b16 %v1524
        %v1540 = vpack.c.b16 %v1537, %v1536
        %v1541 = vpack.c.b16 %v1539, %v1538
        %v1545 = vsel %vm729, %v1520, 0
        %1547 = vmatprep.subr.bf16.mxu0 0
        %1548 = vmatpush1.bf16.msra.mxu0 0
        %1549 = vmatprep.subr.bf16.mxu0 0
        %1550 = vmatpush1.bf16.msra.mxu0 0
        %1551 = vmatprep.subr.bf16.mxu0 0
        %1552 = vmatpush1.bf16.msra.mxu0 0
        %1553 = vmatprep.subr.bf16.mxu0 0
        %1554 = vmatpush1.bf16.msra.mxu0 0
        %1555 = vmatprep.subr.bf16.mxu0 0
        %1556 = vmatpush1.bf16.msra.mxu0 0
        %1557 = vmatprep.subr.bf16.mxu0 0
        %1558 = vmatpush1.bf16.msra.mxu0 0
        %1559 = vmatprep.subr.bf16.mxu0 0
        %1560 = vmatpush1.bf16.msra.mxu0 %v1541
        %1561 = vmatprep.subr.bf16.mxu0 0
        %1562 = vmatpush1.bf16.msra.mxu0 %v1540
        %1563 = vmatprep.subr.bf16.mxu0 0
        %1564 = vmatpush2.bf16.msra.mxu0 0
        %1565 = vmatprep.subr.bf16.mxu0 0
        %1566 = vmatpush2.bf16.msra.mxu0 0
        %1567 = vmatprep.subr.bf16.mxu0 0
        %1568 = vmatpush2.bf16.msra.mxu0 0
        %1569 = vmatprep.subr.bf16.mxu0 0
        %1570 = vmatpush2.bf16.msra.mxu0 0
        %1571 = vmatprep.subr.bf16.mxu0 0
        %1572 = vmatpush2.bf16.msra.mxu0 0
        %1573 = vmatprep.subr.bf16.mxu0 0
        %1574 = vmatpush2.bf16.msra.mxu0 0
        %1575 = vmatprep.subr.bf16.mxu0 0
        %1576 = vmatpush2.bf16.msra.mxu0 0
        %1577 = vmatprep.subr.bf16.mxu0 0
        %1578 = vmatpush2.bf16.msra.mxu0 0
        %1579 = vmatprep.mubr.bf16.mxu0 0
        %1580 = vmatmul.mubr.bf16.gmra.mxu0 %v1545
        %v1581 = vpop.f32.mrf.mxu0
        %v1582 = vadd.f32 %v1530, %v1581
        %v1583 = vpop.f32.mrf.mxu0
        %v1584 = vpop.f32.mrf.mxu0
        %v1585 = vpop.f32.mrf.mxu0
        %1586 = vdwg.mxu0
        %v1587 = vmul.f32 %v1582, %v1582
        %v1588 = vmul.f32 %v1582, %v1587
        %v1589 = vmul.f32 %v1588, 0.044715
        %v1590 = vadd.f32 %v1582, %v1589
        %v1591 = vmul.f32 %v1590, 0.7978846
        %v1592 = vtanh.pop %v1591
        %v1593 = vadd.f32 %v1592, 1.0
        %v1594 = vmul.f32 %v1593, 0.5
        %v1595 = vmul.f32 %v1582, %v1594
        %v1596 = vpack.c.bf16 %v1595, %v1595
        %v1597 = vld [vmem:[%s17] sm:$0xf]
        %v1598 = vld [vmem:[%s17 + $0x4] sm:$0xf]
        %v1599 = vld [vmem:[%s17 + $0x8] sm:$0xf]
        %v1600 = vld [vmem:[%s17 + $0xc] sm:$0xf]
        %v1601 = vld [vmem:[%s17 + $0x10] sm:$0xf]
        %v1602 = vld [vmem:[%s17 + $0x14] sm:$0xf]
        %v1603 = vld [vmem:[%s17 + $0x18] sm:$0xf]
        %v1604 = vld [vmem:[%s17 + $0x1c] sm:$0xf]
        %v1605 = vld [vmem:[%s18] sm:$0x1]
        %v1607 = vlaneseq
        %v1608 = vshrl.u32 %v1607, 7
        %v1609 = vsub.s32 0, %v1608
        %v1610 = vrot.slane %v1605, %v1609
        %v1620 = vunpack.c.l.b16 %v1597
        %v1621 = vunpack.c.l.b16 %v1598
        %v1622 = vunpack.c.l.b16 %v1599
        %v1623 = vunpack.c.l.b16 %v1600
        %v1624 = vunpack.c.l.b16 %v1601
        %v1625 = vunpack.c.l.b16 %v1602
        %v1626 = vunpack.c.l.b16 %v1603
        %v1627 = vunpack.c.l.b16 %v1604
        %v1628 = vpack.c.b16 %v1621, %v1620
        %v1629 = vpack.c.b16 %v1623, %v1622
        %v1630 = vpack.c.b16 %v1625, %v1624
        %v1631 = vpack.c.b16 %v1627, %v1626
        %vm1636 = vcmask 523264
        %v1638 = vsel %vm1636, %v1596, 0
        %1640 = vmatprep.subr.bf16.mxu0 0
        %1641 = vmatpush1.bf16.msra.mxu0 0
        %1642 = vmatprep.subr.bf16.mxu0 0
        %1643 = vmatpush1.bf16.msra.mxu0 0
        %1644 = vmatprep.subr.bf16.mxu0 0
        %1645 = vmatpush1.bf16.msra.mxu0 0
        %1646 = vmatprep.subr.bf16.mxu0 0
        %1647 = vmatpush1.bf16.msra.mxu0 0
        %1648 = vmatprep.subr.bf16.mxu0 0
        %1649 = vmatpush1.bf16.msra.mxu0 %v1631
        %1650 = vmatprep.subr.bf16.mxu0 0
        %1651 = vmatpush1.bf16.msra.mxu0 %v1630
        %1652 = vmatprep.subr.bf16.mxu0 0
        %1653 = vmatpush1.bf16.msra.mxu0 %v1629
        %1654 = vmatprep.subr.bf16.mxu0 0
        %1655 = vmatpush1.bf16.msra.mxu0 %v1628
        %1656 = vmatprep.subr.bf16.mxu0 0
        %1657 = vmatpush2.bf16.msra.mxu0 0
        %1658 = vmatprep.subr.bf16.mxu0 0
        %1659 = vmatpush2.bf16.msra.mxu0 0
        %1660 = vmatprep.subr.bf16.mxu0 0
        %1661 = vmatpush2.bf16.msra.mxu0 0
        %1662 = vmatprep.subr.bf16.mxu0 0
        %1663 = vmatpush2.bf16.msra.mxu0 0
        %1664 = vmatprep.subr.bf16.mxu0 0
        %1665 = vmatpush2.bf16.msra.mxu0 0
        %1666 = vmatprep.subr.bf16.mxu0 0
        %1667 = vmatpush2.bf16.msra.mxu0 0
        %1668 = vmatprep.subr.bf16.mxu0 0
        %1669 = vmatpush2.bf16.msra.mxu0 0
        %1670 = vmatprep.subr.bf16.mxu0 0
        %1671 = vmatpush2.bf16.msra.mxu0 0
        %1672 = vmatprep.mubr.bf16.mxu0 0
        %1673 = vmatmul.mubr.bf16.gmra.mxu0 %v1638
        %v1674 = vpop.f32.mrf.mxu0
        %v1675 = vadd.f32 %v1610, %v1674
        %v1676 = vpop.f32.mrf.mxu0
        %v1677 = vpop.f32.mrf.mxu0
        %v1678 = vpop.f32.mrf.mxu0
        %1679 = vdwg.mxu0
        %v1680 = vadd.f32 %v1675, %v1519
        %v1681 = vld [vmem:[%s19] sm:$0x1]
        %v1682 = vld [vmem:[%s20] sm:$0x1]
        %v1683 = vsel %vm729, %v1680, 0.0
        %1684 = vadd.xlane.f32.xlu0 %v1683
        %v1685 = vpop.xlane.xlu0 %1684
        %v1686 = vmul.f32 %v1685, %v733
        %v1687 = vsub.f32 %v1680, %v1686
        %v1688 = vmul.f32 %v1687, %v1687
        %v1689 = vsel %vm729, %v1688, 0.0
        %1690 = vadd.xlane.f32.xlu0 %v1689
        %v1691 = vpop.xlane.xlu0 %1690
        %v1692 = vmul.f32 %v1691, %v733
        %v1693 = vadd.f32 %v1692, 1e-12
        %v1694 = vrsqrt.pop %v1693
        %v1695 = vmul.f32 %v1687, %v1694
        %v1697 = vlaneseq
        %v1698 = vshrl.u32 %v1697, 7
        %v1699 = vsub.s32 0, %v1698
        %v1700 = vrot.slane %v1681, %v1699
        %v1702 = vmul.f32 %v1695, %v1700
        %v1704 = vlaneseq
        %v1705 = vshrl.u32 %v1704, 7
        %v1706 = vsub.s32 0, %v1705
        %v1707 = vrot.slane %v1682, %v1706
        %v1709 = vadd.f32 %v1702, %v1707
        %1710 = vst.msk [vmem:[%s715] sm:$0xff] %vm729, %v1709
        %s1711 = sand.u32 %s497, 1
        %s1712 = scalar_lea.sflag [#allocation4], %s1711
        %s1713 = sand.u32 %s497, 1
        %s1714 = smul.addr %s1713, 8
        %s1715 = scalar_lea.vmem [#allocation10], %s1714
        // Predicated region
        $region121: #{tpu_custom_call.1} parent=103 // pred_check
          %p1716 = pneg %p507
        $region122: #{tpu_custom_call.1} parent=103 // pred_check_branch
          %1718 = sbr.rel (%p1716) target = $region124
        $region123: #{tpu_custom_call.1} parent=103 // pred_region
          %s1720 = ssub.s32 128, 128
          %1721 = vsyncadd %s1712, %s1720
          %s1722 = smul.addr %s38, 128
          %s1723 = scalar_lea.hbm %s21, %s1722
          %s1725 = sshll.u32 %s1715, 4
          %s1726 = int_to_ptr.vmem [resolvable:$true] %s1725
          %1728 = dma.vmem_to_hbm [thread:$0]  %s1726, 128, %s1723, %s1712
        $region124: #{tpu_custom_call.1} parent=103 // pred_fallthru
          _
      $region104: #{tpu_custom_call.1} parent=5 // pred_fallthru
        _
      %p1729 = scmp.le.s32.totalorder 2, %s33
      // Predicated region
      $region125: #{tpu_custom_call.1} parent=5 // pred_check
        %p1730 = pneg %p1729
      $region126: #{tpu_custom_call.1} parent=5 // pred_check_branch
        %1732 = sbr.rel (%p1730) target = $region128
      $region127: #{tpu_custom_call.1} parent=5 // pred_region
        %s1733 = ssub.s32 %s33, 2
        // Predicated region
        $region129: #{tpu_custom_call.1} parent=127 // pred_check
          %p1734 = pneg %p513
        $region130: #{tpu_custom_call.1} parent=127 // pred_check_branch
          %1736 = sbr.rel (%p1734) target = $region132
        $region131: #{tpu_custom_call.1} parent=127 // pred_region
          %s1737 = sand.u32 %s498, 1
          %s1738 = scalar_lea.sflag [#allocation4], %s1737
          %s1739 = sand.u32 %s498, 1
          %s1740 = smul.addr %s1739, 8
          %s1741 = scalar_lea.vmem [#allocation10], %s1740
          %1742 = dma.done %s1738, 128
        $region132: #{tpu_custom_call.1} parent=127 // pred_fallthru
          _
      $region128: #{tpu_custom_call.1} parent=5 // pred_fallthru
        _
    $region6: #{tpu_custom_call.1} parent=1 // loop_footer
      %s37 = sadd.s32 1, %s33
    $region7: #{tpu_custom_call.1} parent=1 // loop_footer_branch
      %32 = sbr.rel target = $region3
    $region8: #{tpu_custom_call.1} parent=1 // loop_exit
      _
    %1743 = vsyncpa [#allocation3], 1
    %s1744 = scalar_lea.sflag [#allocation3], 1
    %1745 = vsyncpa %s1744, 1
    %1746 = vsyncpa [#allocation6], 1
    %1747 = vsyncpa [#allocation9], 1
    %1748 = vsyncpa [#allocation4], 1
    %s1749 = scalar_lea.sflag [#allocation4], 1
    %1750 = vsyncpa %s1749, 1

</llo_original>
